<compile_context>
chip_gen: v5e
topology: v5e:2x2
jax: 0.10.0
libtpu: 0.0.40
codegen_flags: <defaults>
</compile_context>

<pallas_src>
import numpy as np
import jax
import jax.numpy as jnp
from jax.experimental import pallas as pl
from jax.experimental.pallas import tpu as pltpu

# ---------------------------------------------------------------------------------- #
# Small power-of-two configuration consistent with the module's __init__.
N_CHANNELS = 3
INPUT_SIZE = 16
HIDDEN_DIMS = [4, 8, 16, 32]          # input_size // 2**len(hidden_dims) == 1
LEAKY_SLOPE = 0.2
BN_EPS = 0.8                          # nn.BatchNorm2d(out_channels, 0.8): 2nd arg = eps
LANE = 128                            # lane width / MXU tile
TM = 128                              # batch tile (GEMM M) per grid step

# Layer-1 output-row-group split (stride-2 conv: top 4 output rows read input rows
# 0..7; bottom 4 output rows read input rows 7..15).
K_TOP = N_CHANNELS * 8 * INPUT_SIZE        # 384
K_BOT_REAL = N_CHANNELS * 9 * INPUT_SIZE   # 432
K_BOT = 512                                # padded to a multiple of 128

# Row offsets of each layer's weight block inside the single (W_ROWS, 128) slab.
O1T = 0
O1B = O1T + K_TOP          # 384
O2A = O1B + K_BOT          # 896   layer-2 rows fed by the top half of act1
O2B = O2A + 128            # 1024  layer-2 rows fed by the bottom half of act1
O3 = O2B + 128             # 1152
O4 = O3 + 128              # 1280
OL = O4 + 128              # 1408
W_ROWS = OL + 128          # 1536


# --------------------------------- Pallas kernel ----------------------------------- #

def fused_discriminator_kernel(xt_ref, xb_ref, w_ref, b_ref, o_ref):
    """Entire Discriminator forward for one 128-sample batch tile.

    All conv layers are pre-unrolled (and BN pre-folded) into 128-lane GEMM blocks of
    the resident weight slab; activations stay in VMEM/vregs in bf16, accumulation f32.
    """
    f32 = jnp.float32
    bf16 = jnp.bfloat16

    def lrelu(y):
        return jnp.maximum(y, LEAKY_SLOPE * y)          # LeakyReLU(0.2), 1 VALU op

    def mm(a, r0, r1):
        return jnp.dot(a, w_ref[r0:r1, :], preferred_element_type=f32)

    # conv block 1: stride-2 3x3 conv as two output-row-group GEMMs (no BN for i==0).
    a_top = lrelu(mm(xt_ref[...], O1T, O1B) + b_ref[0:1, :]).astype(bf16)
    a_bot = lrelu(mm(xb_ref[...], O1B, O2A) + b_ref[1:2, :]).astype(bf16)
    # conv block 2: consumes the two halves as two K-chunks (no concat needed).
    h = lrelu(mm(a_top, O2A, O2B) + mm(a_bot, O2B, O3) + b_ref[2:3, :]).astype(bf16)
    # conv block 3 (BN of block 2 pre-folded into this block's weights/bias).
    h = lrelu(mm(h, O3, O4) + b_ref[3:4, :]).astype(bf16)
    # conv block 4 (BN of block 3 pre-folded).
    h = lrelu(mm(h, O4, OL) + b_ref[4:5, :]).astype(bf16)
    # Flatten + Linear (BN of block 4 pre-folded); logit lives in lane 0.
    y = mm(h, OL, W_ROWS) + b_ref[5:6, :]
    o_ref[...] = y[:, 0:1]


# ------------------------- parameter preparation (host, once) ---------------------- #

def _conv_unroll_matrix(w_khkwio, H, W):
    """Dense (Cin*H*W, Cout*Ho*Wo) matrix equivalent to Conv2d(3x3, stride=2, pad=1)
    acting on an NCHW-flattened input and producing an NCHW-flattened output."""
    w = np.asarray(w_khkwio, np.float32)               # (3, 3, cin, cout)
    Cin, Cout = int(w.shape[2]), int(w.shape[3])
    Ho, Wo = H // 2, W // 2
    A = np.zeros((Cin, H * W, Cout, Ho * Wo), np.float32)
    for kh in range(3):
        for kw in range(3):
            for ho in range(Ho):
                hi = 2 * ho + kh - 1
                if hi < 0 or hi >= H:
                    continue
                for wo in range(Wo):
                    wi = 2 * wo + kw - 1
                    if wi < 0 or wi >= W:
                        continue
                    A[:, hi * W + wi, :, ho * Wo + wo] += w[kh, kw, :, :]
    return A.reshape(Cin * H * W, Cout * Ho * Wo)


def prepare_params(params, lin_w, lin_b):
    """Build the single bf16 weight slab and f32 bias slab.

    Layer 1 is split into two output-row-group GEMMs; layers 2-4 are dense unrolled;
    eval-mode BatchNorm of layers 2-4 is folded into the following layer; all K/N dims
    are zero-padded to 128-aligned blocks."""
    p1, p2, p3, p4 = params

    # ---- layer 1: Conv2d(3, 4, 3, 2, 1) on 16x16 -> 8x8, split top/bottom rows ----
    A1 = _conv_unroll_matrix(p1["w"], 16, 16)                       # (768, 256)
    rows_top = [c * 256 + h * 16 + w
                for c in range(3) for h in range(0, 8) for w in range(16)]     # 384
    rows_bot = [c * 256 + h * 16 + w
                for c in range(3) for h in range(7, 16) for w in range(16)]    # 432
    cols_top = [c * 64 + h * 8 + w
                for c in range(4) for h in range(0, 4) for w in range(8)]      # 128
    cols_bot = [c * 64 + h * 8 + w
                for c in range(4) for h in range(4, 8) for w in range(8)]      # 128
    W1t = A1[np.ix_(rows_top, cols_top)]                            # (384, 128)
    W1b = A1[np.ix_(rows_bot, cols_bot)]                            # (432, 128)
    W1b = np.pad(W1b, ((0, K_BOT - K_BOT_REAL), (0, 0)))            # (512, 128)
    b1_full = np.repeat(np.asarray(p1["b"], np.float32), 64)        # per-element bias
    b1t, b1b = b1_full[cols_top], b1_full[cols_bot]

    # ---- layer 2: rows permuted to the [top | bottom] activation order; no BN before
    A2 = _conv_unroll_matrix(p2["w"], 8, 8)                         # (256, 128)
    W2 = A2[np.asarray(cols_top + cols_bot), :]                     # (256, 128)
    b2 = np.repeat(np.asarray(p2["b"], np.float32), 16)             # (128,)

    # ---- layer 3: fold BN of layer 2 (per-channel over 4x4 spatial) ----
    A3 = _conv_unroll_matrix(p3["w"], 4, 4)                         # (128, 64)
    s2 = np.repeat(np.asarray(p2["scale"], np.float32), 16)
    t2 = np.repeat(np.asarray(p2["shift"], np.float32), 16)
    W3 = s2[:, None] * A3
    b3 = np.repeat(np.asarray(p3["b"], np.float32), 4) + t2 @ A3    # (64,)
    W3 = np.pad(W3, ((0, 0), (0, LANE - 64)))
    b3 = np.pad(b3, (0, LANE - 64))

    # ---- layer 4: fold BN of layer 3 ----
    A4 = _conv_unroll_matrix(p4["w"], 2, 2)                         # (64, 32)
    s3 = np.repeat(np.asarray(p3["scale"], np.float32), 4)
    t3 = np.repeat(np.asarray(p3["shift"], np.float32), 4)
    W4 = s3[:, None] * A4
    b4 = np.asarray(p4["b"], np.float32) + t3 @ A4                  # (32,)
    W4 = np.pad(W4, ((0, LANE - 64), (0, LANE - 32)))
    b4 = np.pad(b4, (0, LANE - 32))

    # ---- final Linear: fold BN of layer 4 ----
    s4 = np.asarray(p4["scale"], np.float32)
    t4 = np.asarray(p4["shift"], np.float32)
    lw = np.asarray(lin_w, np.float32)                              # (32, 1)
    lb = np.asarray(lin_b, np.float32)                              # (1,)
    WL = s4[:, None] * lw
    bl = lb + t4 @ lw
    WL = np.pad(WL, ((0, LANE - 32), (0, LANE - 1)))
    bl = np.pad(bl, (0, LANE - 1))

    w_slab = np.concatenate([W1t, W1b, W2, W3, W4, WL], axis=0)     # (1536, 128)
    assert w_slab.shape == (W_ROWS, LANE)
    b_slab = np.zeros((8, LANE), np.float32)
    for i, b in enumerate([b1t, b1b, b2, b3, b4, bl]):
        b_slab[i, :] = b
    return jnp.asarray(w_slab, jnp.bfloat16), jnp.asarray(b_slab, jnp.float32)


def init_params(key):
    """Deterministic synthetic parameters matching the module's shapes (eval mode)."""
    params = []
    in_c = N_CHANNELS
    for i, out_c in enumerate(HIDDEN_DIMS):
        key, kw, kb, kg, kbt = jax.random.split(key, 5)
        fan_in = 9 * in_c
        w = jax.random.normal(kw, (3, 3, in_c, out_c), jnp.float32) / jnp.sqrt(fan_in)
        b = 0.1 * jax.random.normal(kb, (out_c,), jnp.float32)
        if i != 0:
            gamma = 1.0 + 0.1 * jax.random.normal(kg, (out_c,), jnp.float32)
            beta = 0.1 * jax.random.normal(kbt, (out_c,), jnp.float32)
            running_mean = jnp.zeros((out_c,), jnp.float32)     # PyTorch default init
            running_var = jnp.ones((out_c,), jnp.float32)       # PyTorch default init
            scale = gamma / jnp.sqrt(running_var + BN_EPS)
            shift = beta - running_mean * scale
        else:
            scale = jnp.ones((out_c,), jnp.float32)
            shift = jnp.zeros((out_c,), jnp.float32)
        params.append(dict(w=w, b=b, scale=scale, shift=shift))
        in_c = out_c

    feat = (INPUT_SIZE // (2 ** len(HIDDEN_DIMS))) ** 2 * HIDDEN_DIMS[-1]
    key, kw, kb = jax.random.split(key, 3)
    lin_w = jax.random.normal(kw, (feat, 1), jnp.float32) / jnp.sqrt(feat)
    lin_b = 0.1 * jax.random.normal(kb, (1,), jnp.float32)
    return params, lin_w, lin_b


# ----------------------------------- forward --------------------------------------- #

def discriminator_forward(x_nchw, prepared):
    w_slab, b_slab = prepared
    n = x_nchw.shape[0]
    n_pad = ((n + TM - 1) // TM) * TM
    x = x_nchw.astype(jnp.float32)
    if n_pad != n:
        x = jnp.pad(x, ((0, n_pad - n), (0, 0), (0, 0), (0, 0)))
    # Layer-1 input row groups (NCHW-flattened); bf16 matmul inputs, f32 accumulation.
    x_top = x[:, :, 0:8, :].reshape(n_pad, K_TOP).astype(jnp.bfloat16)
    x_bot = x[:, :, 7:16, :].reshape(n_pad, K_BOT_REAL)
    x_bot = jnp.pad(x_bot, ((0, 0), (0, K_BOT - K_BOT_REAL))).astype(jnp.bfloat16)

    out = pl.pallas_call(
        fused_discriminator_kernel,
        out_shape=jax.ShapeDtypeStruct((n_pad, 1), jnp.float32),
        grid=(n_pad // TM,),
        in_specs=[
            pl.BlockSpec((TM, K_TOP), lambda i: (i, 0)),        # activations: tiled
            pl.BlockSpec((TM, K_BOT), lambda i: (i, 0)),
            pl.BlockSpec((W_ROWS, LANE), lambda i: (0, 0)),     # weights: resident
            pl.BlockSpec((8, LANE), lambda i: (0, 0)),          # biases: resident
        ],
        out_specs=pl.BlockSpec((TM, 1), lambda i: (i, 0)),
        compiler_params=pltpu.CompilerParams(
            dimension_semantics=("parallel",)),                 # megacore on v7x
    )(x_top, x_bot, w_slab, b_slab)
    return out[:n, 0]                                           # x.view(-1)


# --------------------------- pure-JAX reference (sanity) --------------------------- #

def _reference_forward(x_nchw, params, lin_w, lin_b):
    x = x_nchw.astype(jnp.float32)
    for p in params:
        w_oihw = jnp.transpose(p["w"], (3, 2, 0, 1))
        x = jax.lax.conv_general_dilated(
            x, w_oihw, window_strides=(2, 2), padding=((1, 1), (1, 1)),
            dimension_numbers=("NCHW", "OIHW", "NCHW"),
            precision=jax.lax.Precision.HIGHEST)
        x = x + p["b"].reshape(1, -1, 1, 1)
        x = jnp.where(x >= 0.0, x, LEAKY_SLOPE * x)
        x = x * p["scale"].reshape(1, -1, 1, 1) + p["shift"].reshape(1, -1, 1, 1)
    feat = x.reshape(x.shape[0], -1)                            # nn.Flatten(): NCHW order
    y = jnp.dot(feat, lin_w, precision=jax.lax.Precision.HIGHEST) + lin_b
    return y.reshape(-1)


# TODO(synk): Dropout2d(0.25) and BatchNorm2d batch-statistic updates are training-time
#             stochastic/stateful behaviors; this kernel is the deterministic eval-mode
#             forward (running stats folded into the next layer at prep time).
# TODO(synk): a full im2col (output-spatial-in-M) layer-1 would remove the remaining
#             zero-FLOPs but needs an in-kernel (TM*64,4)->(TM,256) relayout; the 2-way
#             row-group split keeps every GEMM 128-aligned with no relayout instead.

if __name__ == "__main__":
    key = jax.random.PRNGKey(0)
    key, kx, kp = jax.random.split(key, 3)
    x = jax.random.normal(kx, (2, N_CHANNELS, INPUT_SIZE, INPUT_SIZE), jnp.float32)
    params, lin_w, lin_b = init_params(kp)
    prepared = prepare_params(params, lin_w, lin_b)

    out = jax.block_until_ready(discriminator_forward(x, prepared))
    assert out.shape == (2,) and out.dtype == jnp.float32

    ref = jax.block_until_ready(_reference_forward(x, params, lin_w, lin_b))
    # bf16 matmul inputs (f32 accumulation) -> loosened tolerance vs the f32 reference.
    assert jnp.allclose(out, ref, atol=5e-2, rtol=5e-2), (out, ref)
    print("KERNEL_OK")
</pallas_src>

<mosaic_0001>
module attributes {stable_mosaic.version = 11 : i64} {
  func.func @fused_discriminator_kernel(%arg0: i32, %arg1: memref<128x384xbf16, #tpu.memory_space<vmem>>, %arg2: memref<128x512xbf16, #tpu.memory_space<vmem>>, %arg3: memref<1536x128xbf16, #tpu.memory_space<vmem>>, %arg4: memref<8x128xf32, #tpu.memory_space<vmem>>, %arg5: memref<128x1xf32, #tpu.memory_space<vmem>>) attributes {dimension_semantics = [#tpu.dimension_semantics<parallel>], iteration_bounds = array<i64: 1>, scalar_prefetch = 0 : i64, scratch_operands = 0 : i64, tpu.core_type = #tpu.core_type<tc>, window_params = [{transform_indices = @transform_0, window_bounds = array<i64: 128, 384>}, {transform_indices = @transform_1, window_bounds = array<i64: 128, 512>}, {pipeline_mode = #tpu.pipeline_mode<synchronous>, transform_indices = @transform_2, window_bounds = array<i64: 1536, 128>}, {pipeline_mode = #tpu.pipeline_mode<synchronous>, transform_indices = @transform_3, window_bounds = array<i64: 8, 128>}, {transform_indices = @transform_4, window_bounds = array<i64: 128, 1>}]} {
    %c0 = arith.constant 0 : index
    %c0_0 = arith.constant 0 : index
    %0 = vector.load %arg1[%c0, %c0_0] : memref<128x384xbf16, #tpu.memory_space<vmem>>, vector<128x384xbf16>
    %c0_1 = arith.constant 0 : index
    %c0_2 = arith.constant 0 : index
    %1 = vector.load %arg3[%c0_1, %c0_2] : memref<1536x128xbf16, #tpu.memory_space<vmem>>, vector<384x128xbf16>
    %cst = arith.constant dense<0.000000e+00> : vector<128x128xf32>
    %2 = tpu.matmul %0, %1, %cst {dimension_numbers = #tpu.dot_dimension_numbers<[1], [0], [0], [1], [0, 0, 1, 1], [], []>} : vector<128x384xbf16>, vector<384x128xbf16>, vector<128x128xf32> -> vector<128x128xf32>
    %c0_3 = arith.constant 0 : index
    %c0_4 = arith.constant 0 : index
    %3 = vector.load %arg4[%c0_3, %c0_4] : memref<8x128xf32, #tpu.memory_space<vmem>>, vector<1x128xf32>
    %4 = vector.broadcast %3 : vector<1x128xf32> to vector<128x128xf32>
    %5 = arith.addf %2, %4 : vector<128x128xf32>
    %cst_5 = arith.constant 2.000000e-01 : f32
    %6 = vector.broadcast %cst_5 : f32 to vector<128x128xf32>
    %7 = arith.mulf %6, %5 : vector<128x128xf32>
    %8 = arith.maximumf %5, %7 : vector<128x128xf32>
    %9 = arith.truncf %8 : vector<128x128xf32> to vector<128x128xbf16>
    %c0_6 = arith.constant 0 : index
    %c0_7 = arith.constant 0 : index
    %10 = vector.load %arg2[%c0_6, %c0_7] : memref<128x512xbf16, #tpu.memory_space<vmem>>, vector<128x512xbf16>
    %c384 = arith.constant 384 : index
    %c0_8 = arith.constant 0 : index
    %11 = vector.load %arg3[%c384, %c0_8] : memref<1536x128xbf16, #tpu.memory_space<vmem>>, vector<512x128xbf16>
    %cst_9 = arith.constant dense<0.000000e+00> : vector<128x128xf32>
    %12 = tpu.matmul %10, %11, %cst_9 {dimension_numbers = #tpu.dot_dimension_numbers<[1], [0], [0], [1], [0, 0, 1, 1], [], []>} : vector<128x512xbf16>, vector<512x128xbf16>, vector<128x128xf32> -> vector<128x128xf32>
    %c1 = arith.constant 1 : index
    %c0_10 = arith.constant 0 : index
    %13 = vector.load %arg4[%c1, %c0_10] : memref<8x128xf32, #tpu.memory_space<vmem>>, vector<1x128xf32>
    %14 = vector.broadcast %13 : vector<1x128xf32> to vector<128x128xf32>
    %15 = arith.addf %12, %14 : vector<128x128xf32>
    %cst_11 = arith.constant 2.000000e-01 : f32
    %16 = vector.broadcast %cst_11 : f32 to vector<128x128xf32>
    %17 = arith.mulf %16, %15 : vector<128x128xf32>
    %18 = arith.maximumf %15, %17 : vector<128x128xf32>
    %19 = arith.truncf %18 : vector<128x128xf32> to vector<128x128xbf16>
    %c896 = arith.constant 896 : index
    %c0_12 = arith.constant 0 : index
    %20 = vector.load %arg3[%c896, %c0_12] : memref<1536x128xbf16, #tpu.memory_space<vmem>>, vector<128x128xbf16>
    %cst_13 = arith.constant dense<0.000000e+00> : vector<128x128xf32>
    %21 = tpu.matmul %9, %20, %cst_13 {dimension_numbers = #tpu.dot_dimension_numbers<[1], [0], [0], [1], [0, 0, 1, 1], [], []>} : vector<128x128xbf16>, vector<128x128xbf16>, vector<128x128xf32> -> vector<128x128xf32>
    %c1024 = arith.constant 1024 : index
    %c0_14 = arith.constant 0 : index
    %22 = vector.load %arg3[%c1024, %c0_14] : memref<1536x128xbf16, #tpu.memory_space<vmem>>, vector<128x128xbf16>
    %cst_15 = arith.constant dense<0.000000e+00> : vector<128x128xf32>
    %23 = tpu.matmul %19, %22, %cst_15 {dimension_numbers = #tpu.dot_dimension_numbers<[1], [0], [0], [1], [0, 0, 1, 1], [], []>} : vector<128x128xbf16>, vector<128x128xbf16>, vector<128x128xf32> -> vector<128x128xf32>
    %24 = arith.addf %21, %23 : vector<128x128xf32>
    %c2 = arith.constant 2 : index
    %c0_16 = arith.constant 0 : index
    %25 = vector.load %arg4[%c2, %c0_16] : memref<8x128xf32, #tpu.memory_space<vmem>>, vector<1x128xf32>
    %26 = vector.broadcast %25 : vector<1x128xf32> to vector<128x128xf32>
    %27 = arith.addf %24, %26 : vector<128x128xf32>
    %cst_17 = arith.constant 2.000000e-01 : f32
    %28 = vector.broadcast %cst_17 : f32 to vector<128x128xf32>
    %29 = arith.mulf %28, %27 : vector<128x128xf32>
    %30 = arith.maximumf %27, %29 : vector<128x128xf32>
    %31 = arith.truncf %30 : vector<128x128xf32> to vector<128x128xbf16>
    %c1152 = arith.constant 1152 : index
    %c0_18 = arith.constant 0 : index
    %32 = vector.load %arg3[%c1152, %c0_18] : memref<1536x128xbf16, #tpu.memory_space<vmem>>, vector<128x128xbf16>
    %cst_19 = arith.constant dense<0.000000e+00> : vector<128x128xf32>
    %33 = tpu.matmul %31, %32, %cst_19 {dimension_numbers = #tpu.dot_dimension_numbers<[1], [0], [0], [1], [0, 0, 1, 1], [], []>} : vector<128x128xbf16>, vector<128x128xbf16>, vector<128x128xf32> -> vector<128x128xf32>
    %c3 = arith.constant 3 : index
    %c0_20 = arith.constant 0 : index
    %34 = vector.load %arg4[%c3, %c0_20] : memref<8x128xf32, #tpu.memory_space<vmem>>, vector<1x128xf32>
    %35 = vector.broadcast %34 : vector<1x128xf32> to vector<128x128xf32>
    %36 = arith.addf %33, %35 : vector<128x128xf32>
    %cst_21 = arith.constant 2.000000e-01 : f32
    %37 = vector.broadcast %cst_21 : f32 to vector<128x128xf32>
    %38 = arith.mulf %37, %36 : vector<128x128xf32>
    %39 = arith.maximumf %36, %38 : vector<128x128xf32>
    %40 = arith.truncf %39 : vector<128x128xf32> to vector<128x128xbf16>
    %c1280 = arith.constant 1280 : index
    %c0_22 = arith.constant 0 : index
    %41 = vector.load %arg3[%c1280, %c0_22] : memref<1536x128xbf16, #tpu.memory_space<vmem>>, vector<128x128xbf16>
    %cst_23 = arith.constant dense<0.000000e+00> : vector<128x128xf32>
    %42 = tpu.matmul %40, %41, %cst_23 {dimension_numbers = #tpu.dot_dimension_numbers<[1], [0], [0], [1], [0, 0, 1, 1], [], []>} : vector<128x128xbf16>, vector<128x128xbf16>, vector<128x128xf32> -> vector<128x128xf32>
    %c4 = arith.constant 4 : index
    %c0_24 = arith.constant 0 : index
    %43 = vector.load %arg4[%c4, %c0_24] : memref<8x128xf32, #tpu.memory_space<vmem>>, vector<1x128xf32>
    %44 = vector.broadcast %43 : vector<1x128xf32> to vector<128x128xf32>
    %45 = arith.addf %42, %44 : vector<128x128xf32>
    %cst_25 = arith.constant 2.000000e-01 : f32
    %46 = vector.broadcast %cst_25 : f32 to vector<128x128xf32>
    %47 = arith.mulf %46, %45 : vector<128x128xf32>
    %48 = arith.maximumf %45, %47 : vector<128x128xf32>
    %49 = arith.truncf %48 : vector<128x128xf32> to vector<128x128xbf16>
    %c1408 = arith.constant 1408 : index
    %c0_26 = arith.constant 0 : index
    %50 = vector.load %arg3[%c1408, %c0_26] : memref<1536x128xbf16, #tpu.memory_space<vmem>>, vector<128x128xbf16>
    %cst_27 = arith.constant dense<0.000000e+00> : vector<128x128xf32>
    %51 = tpu.matmul %49, %50, %cst_27 {dimension_numbers = #tpu.dot_dimension_numbers<[1], [0], [0], [1], [0, 0, 1, 1], [], []>} : vector<128x128xbf16>, vector<128x128xbf16>, vector<128x128xf32> -> vector<128x128xf32>
    %c5 = arith.constant 5 : index
    %c0_28 = arith.constant 0 : index
    %52 = vector.load %arg4[%c5, %c0_28] : memref<8x128xf32, #tpu.memory_space<vmem>>, vector<1x128xf32>
    %53 = vector.broadcast %52 : vector<1x128xf32> to vector<128x128xf32>
    %54 = arith.addf %51, %53 : vector<128x128xf32>
    %55 = vector.extract_strided_slice %54 {offsets = [0, 0], sizes = [128, 1], strides = [1, 1]} : vector<128x128xf32> to vector<128x1xf32>
    %c0_29 = arith.constant 0 : index
    %c0_30 = arith.constant 0 : index
    %56 = vector.load %arg5[%c0_29, %c0_30] : memref<128x1xf32, #tpu.memory_space<vmem>>, vector<128x1xf32>
    tpu.vector_store %arg5[%c0_29, %c0_30], %55 {strides = array<i32>} : memref<128x1xf32, #tpu.memory_space<vmem>>, vector<128x1xf32>,
    return
  }
  func.func @transform_0(%arg0: i32) -> (i32, i32) {
    %c0_i32 = arith.constant 0 : i32
    %c0_i32_0 = arith.constant 0 : i32
    return %arg0, %c0_i32 : i32, i32
  }
  func.func @transform_1(%arg0: i32) -> (i32, i32) {
    %c0_i32 = arith.constant 0 : i32
    %c0_i32_0 = arith.constant 0 : i32
    return %arg0, %c0_i32 : i32, i32
  }
  func.func @transform_2(%arg0: i32) -> (i32, i32) {
    %c0_i32 = arith.constant 0 : i32
    %c0_i32_0 = arith.constant 0 : i32
    %c0_i32_1 = arith.constant 0 : i32
    return %c0_i32, %c0_i32_0 : i32, i32
  }
  func.func @transform_3(%arg0: i32) -> (i32, i32) {
    %c0_i32 = arith.constant 0 : i32
    %c0_i32_0 = arith.constant 0 : i32
    %c0_i32_1 = arith.constant 0 : i32
    return %c0_i32, %c0_i32_0 : i32, i32
  }
  func.func @transform_4(%arg0: i32) -> (i32, i32) {
    %c0_i32 = arith.constant 0 : i32
    %c0_i32_0 = arith.constant 0 : i32
    return %arg0, %c0_i32 : i32, i32
  }
}

</mosaic_0001>

<llo_original>
// kernel: tpu_custom_call.1
$region0: #{tpu_custom_call.1}
  #allocation0 [shape = 'u32[]', space=smem, size = 0x4, offset = 0x4, fixed_abs, tag = 'smem constant byte address 0x4 - core index']
  #allocation1 [shape = 'u32[72,128]{1,0:T(1,128)}', space=vmem, size = 0x9000, scoped, tag = 'internal scratch']
  %s0 = inlined_call_operand.hbm [shape: bf16[128,384], index: 0, kind: input, shape index: {}]
  %s1 = inlined_call_operand.hbm [shape: bf16[128,512], index: 1, kind: input, shape index: {}]
  %s2 = inlined_call_operand.hbm [shape: bf16[1536,128], index: 2, kind: input, shape index: {}]
  %s3 = inlined_call_operand.hbm [shape: f32[8,128], index: 3, kind: input, shape index: {}]
  %s4 = inlined_call_operand.vmem [shape: f32[128,1], index: 4, kind: output, shape index: {}]
  %s5 = sld [smem:[#allocation0]]
  $region42: #{tpu_custom_call.1} parent=0
    _
  %s7 = ssub.s32 1, %s5
  %s8 = scalar_select 0, %s7, %s5
  $region1: #{tpu_custom_call.1} parent=0
    #allocation2 [shape = 'u8[98304]{0}', space=vmem, size = 0x18000, scoped, tag = 'input window, operand 0, single buffered']
    #allocation3 [shape = 's32[1]{0}', space=sflag, size = 0x4, scoped, tag = 'scoped memory for tpu_custom_call.1']
    #allocation4 [shape = 'u8[131072]{0}', space=vmem, size = 0x20000, scoped, tag = 'input window, operand 1, single buffered']
    #allocation5 [shape = 's32[1]{0}', space=sflag, size = 0x4, scoped, tag = 'scoped memory for tpu_custom_call.1']
    #allocation6 [shape = 'u8[393216]{0}', space=vmem, size = 0x60000, scoped, tag = 'input window, operand 2, single buffered']
    #allocation7 [shape = 'u8[4096]{0}', space=vmem, size = 0x1000, scoped, tag = 'input window, operand 3, single buffered']
    #allocation8 [shape = 's32[1]{0}', space=sflag, size = 0x4, scoped, tag = 'scoped memory for tpu_custom_call.1']
    %9 = vsyncpa [#allocation3], 0
    %10 = vsyncpa [#allocation5], 0
    %11 = vsyncpa [#allocation8], 0
    // Predicated region
    $region2: #{tpu_custom_call.1} parent=1 // pred_check
      _
    $region3: #{tpu_custom_call.1} parent=1 // pred_check_branch
      %13 = sbr.rel (0) target = $region5
    $region4: #{tpu_custom_call.1} parent=1 // pred_region
      %15 = vsyncadd [#allocation3], 0
      %s16 = sshll.u32 %s0, 4
      %s17 = int_to_ptr.hbm [resolvable:$true] %s16
      %s18 = sshll.u32 [#allocation2], 4
      %s19 = int_to_ptr.vmem [resolvable:$true] %s18
      %24 = dma.hbm_to_vmem [thread:$0]  %s17, 3072, %s19, [#allocation3], 192, 192, 12
    $region5: #{tpu_custom_call.1} parent=1 // pred_fallthru
      _
    // Predicated region
    $region6: #{tpu_custom_call.1} parent=1 // pred_check
      _
    $region7: #{tpu_custom_call.1} parent=1 // pred_check_branch
      %26 = sbr.rel (0) target = $region9
    $region8: #{tpu_custom_call.1} parent=1 // pred_region
      %28 = vsyncadd [#allocation5], 0
      %s29 = sshll.u32 %s1, 4
      %s30 = int_to_ptr.hbm [resolvable:$true] %s29
      %s31 = sshll.u32 [#allocation4], 4
      %s32 = int_to_ptr.vmem [resolvable:$true] %s31
      %37 = dma.hbm_to_vmem [thread:$0]  %s30, 4096, %s32, [#allocation5], 256, 256, 16
    $region9: #{tpu_custom_call.1} parent=1 // pred_fallthru
      _
    // Predicated region
    $region10: #{tpu_custom_call.1} parent=1 // pred_check
      _
    $region11: #{tpu_custom_call.1} parent=1 // pred_check_branch
      %39 = sbr.rel (0) target = $region13
    $region12: #{tpu_custom_call.1} parent=1 // pred_region
      %41 = vsyncadd [#allocation5], 0
      %s42 = sshll.u32 %s2, 4
      %s43 = int_to_ptr.hbm [resolvable:$true] %s42
      %s44 = sshll.u32 [#allocation6], 4
      %s45 = int_to_ptr.vmem [resolvable:$true] %s44
      %50 = dma.hbm_to_vmem [thread:$0]  %s43, 12288, %s45, [#allocation5], 64, 64, 4
    $region13: #{tpu_custom_call.1} parent=1 // pred_fallthru
      _
    // Predicated region
    $region14: #{tpu_custom_call.1} parent=1 // pred_check
      _
    $region15: #{tpu_custom_call.1} parent=1 // pred_check_branch
      %52 = sbr.rel (0) target = $region17
    $region16: #{tpu_custom_call.1} parent=1 // pred_region
      %54 = vsyncadd [#allocation8], 0
      %s56 = sshll.u32 %s3, 4
      %s57 = int_to_ptr.hbm [resolvable:$true] %s56
      %s58 = sshll.u32 [#allocation7], 4
      %s59 = int_to_ptr.vmem [resolvable:$true] %s58
      %61 = dma.hbm_to_vmem [thread:$0]  %s57, 128, %s59, [#allocation8]
    $region17: #{tpu_custom_call.1} parent=1 // pred_fallthru
      _
    // Predicated region
    $region18: #{tpu_custom_call.1} parent=1 // pred_check
      _
    $region19: #{tpu_custom_call.1} parent=1 // pred_check_branch
      %63 = sbr.rel (0) target = $region21
    $region20: #{tpu_custom_call.1} parent=1 // pred_region
      %65 = dma.done [#allocation3], 3072
    $region21: #{tpu_custom_call.1} parent=1 // pred_fallthru
      _
    // Predicated region
    $region22: #{tpu_custom_call.1} parent=1 // pred_check
      _
    $region23: #{tpu_custom_call.1} parent=1 // pred_check_branch
      %67 = sbr.rel (0) target = $region25
    $region24: #{tpu_custom_call.1} parent=1 // pred_region
      %69 = dma.done [#allocation5], 4096
    $region25: #{tpu_custom_call.1} parent=1 // pred_fallthru
      _
    // Predicated region
    $region26: #{tpu_custom_call.1} parent=1 // pred_check
      _
    $region27: #{tpu_custom_call.1} parent=1 // pred_check_branch
      %71 = sbr.rel (0) target = $region29
    $region28: #{tpu_custom_call.1} parent=1 // pred_region
      %73 = dma.done [#allocation5], 12288
    $region29: #{tpu_custom_call.1} parent=1 // pred_fallthru
      _
    // Predicated region
    $region30: #{tpu_custom_call.1} parent=1 // pred_check
      _
    $region31: #{tpu_custom_call.1} parent=1 // pred_check_branch
      %75 = sbr.rel (0) target = $region33
    $region32: #{tpu_custom_call.1} parent=1 // pred_region
      %77 = dma.done [#allocation8], 128
    $region33: #{tpu_custom_call.1} parent=1 // pred_fallthru
      _
    %v78 = vld [vmem:[#allocation2] sm:$0xff]
    %v79 = vld [vmem:[#allocation2 + $0x8] sm:$0xf]
    %v80 = vld [vmem:[#allocation2 + $0xc] sm:$0xff]
    %v81 = vld [vmem:[#allocation2 + $0x14] sm:$0xf]
    %v82 = vld [vmem:[#allocation2 + $0x18] sm:$0xff]
    %v83 = vld [vmem:[#allocation2 + $0x20] sm:$0xf]
    %v84 = vld [vmem:[#allocation2 + $0x24] sm:$0xff]
    %v85 = vld [vmem:[#allocation2 + $0x2c] sm:$0xf]
    %v86 = vld [vmem:[#allocation2 + $0x30] sm:$0xff]
    %v87 = vld [vmem:[#allocation2 + $0x38] sm:$0xf]
    %v88 = vld [vmem:[#allocation2 + $0x3c] sm:$0xff]
    %v89 = vld [vmem:[#allocation2 + $0x44] sm:$0xf]
    %v90 = vld [vmem:[#allocation2 + $0x48] sm:$0xff]
    %v91 = vld [vmem:[#allocation2 + $0x50] sm:$0xf]
    %v92 = vld [vmem:[#allocation2 + $0x54] sm:$0xff]
    %v93 = vld [vmem:[#allocation2 + $0x5c] sm:$0xf]
    %v94 = vld [vmem:[#allocation2 + $0x60] sm:$0xff]
    %v95 = vld [vmem:[#allocation2 + $0x68] sm:$0xf]
    %v96 = vld [vmem:[#allocation2 + $0x6c] sm:$0xff]
    %v97 = vld [vmem:[#allocation2 + $0x74] sm:$0xf]
    %v98 = vld [vmem:[#allocation2 + $0x78] sm:$0xff]
    %v99 = vld [vmem:[#allocation2 + $0x80] sm:$0xf]
    %v100 = vld [vmem:[#allocation2 + $0x84] sm:$0xff]
    %v101 = vld [vmem:[#allocation2 + $0x8c] sm:$0xf]
    %v102 = vld [vmem:[#allocation2 + $0x90] sm:$0xff]
    %v103 = vld [vmem:[#allocation2 + $0x98] sm:$0xf]
    %v104 = vld [vmem:[#allocation2 + $0x9c] sm:$0xff]
    %v105 = vld [vmem:[#allocation2 + $0xa4] sm:$0xf]
    %v106 = vld [vmem:[#allocation2 + $0xa8] sm:$0xff]
    %v107 = vld [vmem:[#allocation2 + $0xb0] sm:$0xf]
    %v108 = vld [vmem:[#allocation2 + $0xb4] sm:$0xff]
    %v109 = vld [vmem:[#allocation2 + $0xbc] sm:$0xf]
    %v110 = vld [vmem:[#allocation6] sm:$0xf]
    %v111 = vld [vmem:[#allocation6 + $0x4] sm:$0xf]
    %v112 = vld [vmem:[#allocation6 + $0x8] sm:$0xf]
    %v113 = vld [vmem:[#allocation6 + $0xc] sm:$0xf]
    %v114 = vld [vmem:[#allocation6 + $0x10] sm:$0xf]
    %v115 = vld [vmem:[#allocation6 + $0x14] sm:$0xf]
    %v116 = vld [vmem:[#allocation6 + $0x18] sm:$0xf]
    %v117 = vld [vmem:[#allocation6 + $0x1c] sm:$0xf]
    %v118 = vld [vmem:[#allocation6 + $0x20] sm:$0xf]
    %v119 = vld [vmem:[#allocation6 + $0x24] sm:$0xf]
    %v120 = vld [vmem:[#allocation6 + $0x28] sm:$0xf]
    %v121 = vld [vmem:[#allocation6 + $0x2c] sm:$0xf]
    %v122 = vld [vmem:[#allocation6 + $0x30] sm:$0xf]
    %v123 = vld [vmem:[#allocation6 + $0x34] sm:$0xf]
    %v124 = vld [vmem:[#allocation6 + $0x38] sm:$0xf]
    %v125 = vld [vmem:[#allocation6 + $0x3c] sm:$0xf]
    %v126 = vld [vmem:[#allocation6 + $0x40] sm:$0xf]
    %v127 = vld [vmem:[#allocation6 + $0x44] sm:$0xf]
    %v128 = vld [vmem:[#allocation6 + $0x48] sm:$0xf]
    %v129 = vld [vmem:[#allocation6 + $0x4c] sm:$0xf]
    %v130 = vld [vmem:[#allocation6 + $0x50] sm:$0xf]
    %v131 = vld [vmem:[#allocation6 + $0x54] sm:$0xf]
    %v132 = vld [vmem:[#allocation6 + $0x58] sm:$0xf]
    %v133 = vld [vmem:[#allocation6 + $0x5c] sm:$0xf]
    %v134 = vld [vmem:[#allocation6 + $0x60] sm:$0xf]
    %v135 = vld [vmem:[#allocation6 + $0x64] sm:$0xf]
    %v136 = vld [vmem:[#allocation6 + $0x68] sm:$0xf]
    %v137 = vld [vmem:[#allocation6 + $0x6c] sm:$0xf]
    %v138 = vld [vmem:[#allocation6 + $0x70] sm:$0xf]
    %v139 = vld [vmem:[#allocation6 + $0x74] sm:$0xf]
    %v140 = vld [vmem:[#allocation6 + $0x78] sm:$0xf]
    %v141 = vld [vmem:[#allocation6 + $0x7c] sm:$0xf]
    %v142 = vld [vmem:[#allocation6 + $0x80] sm:$0xf]
    %v143 = vld [vmem:[#allocation6 + $0x84] sm:$0xf]
    %v144 = vld [vmem:[#allocation6 + $0x88] sm:$0xf]
    %v145 = vld [vmem:[#allocation6 + $0x8c] sm:$0xf]
    %v146 = vld [vmem:[#allocation6 + $0x90] sm:$0xf]
    %v147 = vld [vmem:[#allocation6 + $0x94] sm:$0xf]
    %v148 = vld [vmem:[#allocation6 + $0x98] sm:$0xf]
    %v149 = vld [vmem:[#allocation6 + $0x9c] sm:$0xf]
    %v150 = vld [vmem:[#allocation6 + $0xa0] sm:$0xf]
    %v151 = vld [vmem:[#allocation6 + $0xa4] sm:$0xf]
    %v152 = vld [vmem:[#allocation6 + $0xa8] sm:$0xf]
    %v153 = vld [vmem:[#allocation6 + $0xac] sm:$0xf]
    %v154 = vld [vmem:[#allocation6 + $0xb0] sm:$0xf]
    %v155 = vld [vmem:[#allocation6 + $0xb4] sm:$0xf]
    %v156 = vld [vmem:[#allocation6 + $0xb8] sm:$0xf]
    %v157 = vld [vmem:[#allocation6 + $0xbc] sm:$0xf]
    %v158 = vld [vmem:[#allocation7] sm:$0x1]
    %v159 = vperm.slane %v158, 0
    %v192 = vunpack.c.l.b16 %v78
    %v193 = vunpack.c.h.b16 %v78
    %v194 = vunpack.c.l.b16 %v79
    %v195 = vunpack.c.l.b16 %v80
    %v196 = vunpack.c.h.b16 %v80
    %v197 = vunpack.c.l.b16 %v81
    %v198 = vunpack.c.l.b16 %v82
    %v199 = vunpack.c.h.b16 %v82
    %v200 = vunpack.c.l.b16 %v83
    %v201 = vunpack.c.l.b16 %v84
    %v202 = vunpack.c.h.b16 %v84
    %v203 = vunpack.c.l.b16 %v85
    %v204 = vunpack.c.l.b16 %v86
    %v205 = vunpack.c.h.b16 %v86
    %v206 = vunpack.c.l.b16 %v87
    %v207 = vunpack.c.l.b16 %v88
    %v208 = vunpack.c.h.b16 %v88
    %v209 = vunpack.c.l.b16 %v89
    %v210 = vunpack.c.l.b16 %v90
    %v211 = vunpack.c.h.b16 %v90
    %v212 = vunpack.c.l.b16 %v91
    %v213 = vunpack.c.l.b16 %v92
    %v214 = vunpack.c.h.b16 %v92
    %v215 = vunpack.c.l.b16 %v93
    %v216 = vunpack.c.l.b16 %v94
    %v217 = vunpack.c.h.b16 %v94
    %v218 = vunpack.c.l.b16 %v95
    %v219 = vunpack.c.l.b16 %v96
    %v220 = vunpack.c.h.b16 %v96
    %v221 = vunpack.c.l.b16 %v97
    %v222 = vunpack.c.l.b16 %v98
    %v223 = vunpack.c.h.b16 %v98
    %v224 = vunpack.c.l.b16 %v99
    %v225 = vunpack.c.l.b16 %v100
    %v226 = vunpack.c.h.b16 %v100
    %v227 = vunpack.c.l.b16 %v101
    %v228 = vunpack.c.l.b16 %v102
    %v229 = vunpack.c.h.b16 %v102
    %v230 = vunpack.c.l.b16 %v103
    %v231 = vunpack.c.l.b16 %v104
    %v232 = vunpack.c.h.b16 %v104
    %v233 = vunpack.c.l.b16 %v105
    %v234 = vunpack.c.l.b16 %v106
    %v235 = vunpack.c.h.b16 %v106
    %v236 = vunpack.c.l.b16 %v107
    %v237 = vunpack.c.l.b16 %v108
    %v238 = vunpack.c.h.b16 %v108
    %v239 = vunpack.c.l.b16 %v109
    %v240 = vpack.c.b16 %v195, %v192
    %v241 = vpack.c.b16 %v196, %v193
    %v242 = vpack.c.b16 %v197, %v194
    %v243 = vpack.c.b16 %v201, %v198
    %v244 = vpack.c.b16 %v202, %v199
    %v245 = vpack.c.b16 %v203, %v200
    %v246 = vpack.c.b16 %v207, %v204
    %v247 = vpack.c.b16 %v208, %v205
    %v248 = vpack.c.b16 %v209, %v206
    %v249 = vpack.c.b16 %v213, %v210
    %v250 = vpack.c.b16 %v214, %v211
    %v251 = vpack.c.b16 %v215, %v212
    %v252 = vpack.c.b16 %v219, %v216
    %v253 = vpack.c.b16 %v220, %v217
    %v254 = vpack.c.b16 %v221, %v218
    %v255 = vpack.c.b16 %v225, %v222
    %v256 = vpack.c.b16 %v226, %v223
    %v257 = vpack.c.b16 %v227, %v224
    %v258 = vpack.c.b16 %v231, %v228
    %v259 = vpack.c.b16 %v232, %v229
    %v260 = vpack.c.b16 %v233, %v230
    %v261 = vpack.c.b16 %v237, %v234
    %v262 = vpack.c.b16 %v238, %v235
    %v263 = vpack.c.b16 %v239, %v236
    %v336 = vunpack.c.l.b16 %v110
    %v337 = vunpack.c.l.b16 %v111
    %v338 = vunpack.c.l.b16 %v112
    %v339 = vunpack.c.l.b16 %v113
    %v340 = vunpack.c.l.b16 %v114
    %v341 = vunpack.c.l.b16 %v115
    %v342 = vunpack.c.l.b16 %v116
    %v343 = vunpack.c.l.b16 %v117
    %v344 = vunpack.c.l.b16 %v118
    %v345 = vunpack.c.l.b16 %v119
    %v346 = vunpack.c.l.b16 %v120
    %v347 = vunpack.c.l.b16 %v121
    %v348 = vunpack.c.l.b16 %v122
    %v349 = vunpack.c.l.b16 %v123
    %v350 = vunpack.c.l.b16 %v124
    %v351 = vunpack.c.l.b16 %v125
    %v352 = vunpack.c.l.b16 %v126
    %v353 = vunpack.c.l.b16 %v127
    %v354 = vunpack.c.l.b16 %v128
    %v355 = vunpack.c.l.b16 %v129
    %v356 = vunpack.c.l.b16 %v130
    %v357 = vunpack.c.l.b16 %v131
    %v358 = vunpack.c.l.b16 %v132
    %v359 = vunpack.c.l.b16 %v133
    %v360 = vunpack.c.l.b16 %v134
    %v361 = vunpack.c.l.b16 %v135
    %v362 = vunpack.c.l.b16 %v136
    %v363 = vunpack.c.l.b16 %v137
    %v364 = vunpack.c.l.b16 %v138
    %v365 = vunpack.c.l.b16 %v139
    %v366 = vunpack.c.l.b16 %v140
    %v367 = vunpack.c.l.b16 %v141
    %v368 = vunpack.c.l.b16 %v142
    %v369 = vunpack.c.l.b16 %v143
    %v370 = vunpack.c.l.b16 %v144
    %v371 = vunpack.c.l.b16 %v145
    %v372 = vunpack.c.l.b16 %v146
    %v373 = vunpack.c.l.b16 %v147
    %v374 = vunpack.c.l.b16 %v148
    %v375 = vunpack.c.l.b16 %v149
    %v376 = vunpack.c.l.b16 %v150
    %v377 = vunpack.c.l.b16 %v151
    %v378 = vunpack.c.l.b16 %v152
    %v379 = vunpack.c.l.b16 %v153
    %v380 = vunpack.c.l.b16 %v154
    %v381 = vunpack.c.l.b16 %v155
    %v382 = vunpack.c.l.b16 %v156
    %v383 = vunpack.c.l.b16 %v157
    %v384 = vpack.c.b16 %v337, %v336
    %v385 = vpack.c.b16 %v339, %v338
    %v386 = vpack.c.b16 %v341, %v340
    %v387 = vpack.c.b16 %v343, %v342
    %v388 = vpack.c.b16 %v345, %v344
    %v389 = vpack.c.b16 %v347, %v346
    %v390 = vpack.c.b16 %v349, %v348
    %v391 = vpack.c.b16 %v351, %v350
    %v392 = vpack.c.b16 %v353, %v352
    %v393 = vpack.c.b16 %v355, %v354
    %v394 = vpack.c.b16 %v357, %v356
    %v395 = vpack.c.b16 %v359, %v358
    %v396 = vpack.c.b16 %v361, %v360
    %v397 = vpack.c.b16 %v363, %v362
    %v398 = vpack.c.b16 %v365, %v364
    %v399 = vpack.c.b16 %v367, %v366
    %v400 = vpack.c.b16 %v369, %v368
    %v401 = vpack.c.b16 %v371, %v370
    %v402 = vpack.c.b16 %v373, %v372
    %v403 = vpack.c.b16 %v375, %v374
    %v404 = vpack.c.b16 %v377, %v376
    %v405 = vpack.c.b16 %v379, %v378
    %v406 = vpack.c.b16 %v381, %v380
    %v407 = vpack.c.b16 %v383, %v382
    %432 = vmatpush.bf16.msra.mxu0 %v391
    %433 = vmatpush.bf16.msra.mxu0 %v390
    %434 = vmatpush.bf16.msra.mxu0 %v389
    %435 = vmatpush.bf16.msra.mxu0 %v388
    %436 = vmatpush.bf16.msra.mxu0 %v387
    %437 = vmatpush.bf16.msra.mxu0 %v386
    %438 = vmatpush.bf16.msra.mxu0 %v385
    %439 = vmatpush.bf16.msra.mxu0 %v384
    %440 = vmatmul.bf16.gmra.mxu0 %v240
    %v441 = vpop.f32.mrf.mxu0
    %v442 = vadd.f32 %v159, %v441
    %v443 = vpop.f32.mrf.mxu0
    %v444 = vadd.f32 %v159, %v443
    %445 = vmatmul.bf16.gmra.mxu0 %v243
    %v446 = vpop.f32.mrf.mxu0
    %v447 = vadd.f32 %v159, %v446
    %v448 = vpop.f32.mrf.mxu0
    %v449 = vadd.f32 %v159, %v448
    %450 = vmatmul.bf16.gmra.mxu0 %v246
    %v451 = vpop.f32.mrf.mxu0
    %v452 = vadd.f32 %v159, %v451
    %v453 = vpop.f32.mrf.mxu0
    %v454 = vadd.f32 %v159, %v453
    %455 = vmatmul.bf16.gmra.mxu0 %v249
    %v456 = vpop.f32.mrf.mxu0
    %v457 = vadd.f32 %v159, %v456
    %v458 = vpop.f32.mrf.mxu0
    %v459 = vadd.f32 %v159, %v458
    %460 = vmatmul.bf16.gmra.mxu0 %v252
    %v461 = vpop.f32.mrf.mxu0
    %v462 = vadd.f32 %v159, %v461
    %v463 = vpop.f32.mrf.mxu0
    %v464 = vadd.f32 %v159, %v463
    %465 = vmatmul.bf16.gmra.mxu0 %v255
    %v466 = vpop.f32.mrf.mxu0
    %v467 = vadd.f32 %v159, %v466
    %v468 = vpop.f32.mrf.mxu0
    %v469 = vadd.f32 %v159, %v468
    %470 = vmatmul.bf16.gmra.mxu0 %v258
    %v471 = vpop.f32.mrf.mxu0
    %v472 = vadd.f32 %v159, %v471
    %v473 = vpop.f32.mrf.mxu0
    %v474 = vadd.f32 %v159, %v473
    %475 = vmatmul.bf16.gmra.mxu0 %v261
    %v476 = vpop.f32.mrf.mxu0
    %v477 = vadd.f32 %v159, %v476
    %v478 = vpop.f32.mrf.mxu0
    %v479 = vadd.f32 %v159, %v478
    %480 = vdwg.mxu0
    %481 = vmatpush.bf16.msra.mxu0 %v399
    %482 = vmatpush.bf16.msra.mxu0 %v398
    %483 = vmatpush.bf16.msra.mxu0 %v397
    %484 = vmatpush.bf16.msra.mxu0 %v396
    %485 = vmatpush.bf16.msra.mxu0 %v395
    %486 = vmatpush.bf16.msra.mxu0 %v394
    %487 = vmatpush.bf16.msra.mxu0 %v393
    %488 = vmatpush.bf16.msra.mxu0 %v392
    %489 = vmatmul.bf16.gmra.mxu0 %v241
    %v490 = vpop.f32.mrf.mxu0
    %v491 = vadd.f32 %v442, %v490
    %v492 = vpop.f32.mrf.mxu0
    %v493 = vadd.f32 %v444, %v492
    %494 = vmatmul.bf16.gmra.mxu0 %v244
    %v495 = vpop.f32.mrf.mxu0
    %v496 = vadd.f32 %v447, %v495
    %v497 = vpop.f32.mrf.mxu0
    %v498 = vadd.f32 %v449, %v497
    %499 = vmatmul.bf16.gmra.mxu0 %v247
    %v500 = vpop.f32.mrf.mxu0
    %v501 = vadd.f32 %v452, %v500
    %v502 = vpop.f32.mrf.mxu0
    %v503 = vadd.f32 %v454, %v502
    %504 = vmatmul.bf16.gmra.mxu0 %v250
    %v505 = vpop.f32.mrf.mxu0
    %v506 = vadd.f32 %v457, %v505
    %v507 = vpop.f32.mrf.mxu0
    %v508 = vadd.f32 %v459, %v507
    %509 = vmatmul.bf16.gmra.mxu0 %v253
    %v510 = vpop.f32.mrf.mxu0
    %v511 = vadd.f32 %v462, %v510
    %v512 = vpop.f32.mrf.mxu0
    %v513 = vadd.f32 %v464, %v512
    %514 = vmatmul.bf16.gmra.mxu0 %v256
    %v515 = vpop.f32.mrf.mxu0
    %v516 = vadd.f32 %v467, %v515
    %v517 = vpop.f32.mrf.mxu0
    %v518 = vadd.f32 %v469, %v517
    %519 = vmatmul.bf16.gmra.mxu0 %v259
    %v520 = vpop.f32.mrf.mxu0
    %v521 = vadd.f32 %v472, %v520
    %v522 = vpop.f32.mrf.mxu0
    %v523 = vadd.f32 %v474, %v522
    %524 = vmatmul.bf16.gmra.mxu0 %v262
    %v525 = vpop.f32.mrf.mxu0
    %v526 = vadd.f32 %v477, %v525
    %v527 = vpop.f32.mrf.mxu0
    %v528 = vadd.f32 %v479, %v527
    %529 = vdwg.mxu0
    %530 = vmatpush.bf16.msra.mxu0 %v407
    %531 = vmatpush.bf16.msra.mxu0 %v406
    %532 = vmatpush.bf16.msra.mxu0 %v405
    %533 = vmatpush.bf16.msra.mxu0 %v404
    %534 = vmatpush.bf16.msra.mxu0 %v403
    %535 = vmatpush.bf16.msra.mxu0 %v402
    %536 = vmatpush.bf16.msra.mxu0 %v401
    %537 = vmatpush.bf16.msra.mxu0 %v400
    %538 = vmatmul.bf16.gmra.mxu0 %v242
    %v539 = vpop.f32.mrf.mxu0
    %v540 = vadd.f32 %v491, %v539
    %v541 = vpop.f32.mrf.mxu0
    %v542 = vadd.f32 %v493, %v541
    %543 = vmatmul.bf16.gmra.mxu0 %v245
    %v544 = vpop.f32.mrf.mxu0
    %v545 = vadd.f32 %v496, %v544
    %v546 = vpop.f32.mrf.mxu0
    %v547 = vadd.f32 %v498, %v546
    %548 = vmatmul.bf16.gmra.mxu0 %v248
    %v549 = vpop.f32.mrf.mxu0
    %v550 = vadd.f32 %v501, %v549
    %v551 = vpop.f32.mrf.mxu0
    %v552 = vadd.f32 %v503, %v551
    %553 = vmatmul.bf16.gmra.mxu0 %v251
    %v554 = vpop.f32.mrf.mxu0
    %v555 = vadd.f32 %v506, %v554
    %v556 = vpop.f32.mrf.mxu0
    %v557 = vadd.f32 %v508, %v556
    %558 = vmatmul.bf16.gmra.mxu0 %v254
    %v559 = vpop.f32.mrf.mxu0
    %v560 = vadd.f32 %v511, %v559
    %v561 = vpop.f32.mrf.mxu0
    %v562 = vadd.f32 %v513, %v561
    %563 = vmatmul.bf16.gmra.mxu0 %v257
    %v564 = vpop.f32.mrf.mxu0
    %v565 = vadd.f32 %v516, %v564
    %v566 = vpop.f32.mrf.mxu0
    %v567 = vadd.f32 %v518, %v566
    %568 = vmatmul.bf16.gmra.mxu0 %v260
    %v569 = vpop.f32.mrf.mxu0
    %v570 = vadd.f32 %v521, %v569
    %v571 = vpop.f32.mrf.mxu0
    %v572 = vadd.f32 %v523, %v571
    %573 = vmatmul.bf16.gmra.mxu0 %v263
    %v574 = vpop.f32.mrf.mxu0
    %v575 = vadd.f32 %v526, %v574
    %v576 = vpop.f32.mrf.mxu0
    %v577 = vadd.f32 %v528, %v576
    %578 = vdwg.mxu0
    %v579 = vmul.f32 %v540, 0.2
    %v580 = vmul.f32 %v542, 0.2
    %v581 = vmul.f32 %v545, 0.2
    %v582 = vmul.f32 %v547, 0.2
    %v583 = vmul.f32 %v550, 0.2
    %v584 = vmul.f32 %v552, 0.2
    %v585 = vmul.f32 %v555, 0.2
    %v586 = vmul.f32 %v557, 0.2
    %v587 = vmul.f32 %v560, 0.2
    %v588 = vmul.f32 %v562, 0.2
    %v589 = vmul.f32 %v565, 0.2
    %v590 = vmul.f32 %v567, 0.2
    %v591 = vmul.f32 %v570, 0.2
    %v592 = vmul.f32 %v572, 0.2
    %v593 = vmul.f32 %v575, 0.2
    %v594 = vmul.f32 %v577, 0.2
    %v595 = vmax.f32 %v540, %v579
    %v596 = vmax.f32 %v542, %v580
    %v597 = vmax.f32 %v545, %v581
    %v598 = vmax.f32 %v547, %v582
    %v599 = vmax.f32 %v550, %v583
    %v600 = vmax.f32 %v552, %v584
    %v601 = vmax.f32 %v555, %v585
    %v602 = vmax.f32 %v557, %v586
    %v603 = vmax.f32 %v560, %v587
    %v604 = vmax.f32 %v562, %v588
    %v605 = vmax.f32 %v565, %v589
    %v606 = vmax.f32 %v567, %v590
    %v607 = vmax.f32 %v570, %v591
    %v608 = vmax.f32 %v572, %v592
    %v609 = vmax.f32 %v575, %v593
    %v610 = vmax.f32 %v577, %v594
    %v611 = vpack.c.bf16 %v596, %v595
    %v612 = vpack.c.bf16 %v598, %v597
    %v613 = vpack.c.bf16 %v600, %v599
    %v614 = vpack.c.bf16 %v602, %v601
    %v615 = vpack.c.bf16 %v604, %v603
    %v616 = vpack.c.bf16 %v606, %v605
    %v617 = vpack.c.bf16 %v608, %v607
    %v618 = vpack.c.bf16 %v610, %v609
    %v619 = vld [vmem:[#allocation4] sm:$0xff]
    %v620 = vld [vmem:[#allocation4 + $0x8] sm:$0xff]
    %v621 = vld [vmem:[#allocation4 + $0x10] sm:$0xff]
    %v622 = vld [vmem:[#allocation4 + $0x18] sm:$0xff]
    %v623 = vld [vmem:[#allocation4 + $0x20] sm:$0xff]
    %v624 = vld [vmem:[#allocation4 + $0x28] sm:$0xff]
    %v625 = vld [vmem:[#allocation4 + $0x30] sm:$0xff]
    %v626 = vld [vmem:[#allocation4 + $0x38] sm:$0xff]
    %v627 = vld [vmem:[#allocation4 + $0x40] sm:$0xff]
    %v628 = vld [vmem:[#allocation4 + $0x48] sm:$0xff]
    %v629 = vld [vmem:[#allocation4 + $0x50] sm:$0xff]
    %v630 = vld [vmem:[#allocation4 + $0x58] sm:$0xff]
    %v631 = vld [vmem:[#allocation4 + $0x60] sm:$0xff]
    %v632 = vld [vmem:[#allocation4 + $0x68] sm:$0xff]
    %v633 = vld [vmem:[#allocation4 + $0x70] sm:$0xff]
    %v634 = vld [vmem:[#allocation4 + $0x78] sm:$0xff]
    %v635 = vld [vmem:[#allocation4 + $0x80] sm:$0xff]
    %v636 = vld [vmem:[#allocation4 + $0x88] sm:$0xff]
    %v637 = vld [vmem:[#allocation4 + $0x90] sm:$0xff]
    %v638 = vld [vmem:[#allocation4 + $0x98] sm:$0xff]
    %v639 = vld [vmem:[#allocation4 + $0xa0] sm:$0xff]
    %v640 = vld [vmem:[#allocation4 + $0xa8] sm:$0xff]
    %v641 = vld [vmem:[#allocation4 + $0xb0] sm:$0xff]
    %v642 = vld [vmem:[#allocation4 + $0xb8] sm:$0xff]
    %v643 = vld [vmem:[#allocation4 + $0xc0] sm:$0xff]
    %v644 = vld [vmem:[#allocation4 + $0xc8] sm:$0xff]
    %v645 = vld [vmem:[#allocation4 + $0xd0] sm:$0xff]
    %v646 = vld [vmem:[#allocation4 + $0xd8] sm:$0xff]
    %v647 = vld [vmem:[#allocation4 + $0xe0] sm:$0xff]
    %v648 = vld [vmem:[#allocation4 + $0xe8] sm:$0xff]
    %v649 = vld [vmem:[#allocation4 + $0xf0] sm:$0xff]
    %v650 = vld [vmem:[#allocation4 + $0xf8] sm:$0xff]
    %v651 = vld [vmem:[#allocation6 + $0xc0] sm:$0xf]
    %v652 = vld [vmem:[#allocation6 + $0xc4] sm:$0xf]
    %v653 = vld [vmem:[#allocation6 + $0xc8] sm:$0xf]
    %v654 = vld [vmem:[#allocation6 + $0xcc] sm:$0xf]
    %v655 = vld [vmem:[#allocation6 + $0xd0] sm:$0xf]
    %v656 = vld [vmem:[#allocation6 + $0xd4] sm:$0xf]
    %v657 = vld [vmem:[#allocation6 + $0xd8] sm:$0xf]
    %v658 = vld [vmem:[#allocation6 + $0xdc] sm:$0xf]
    %v659 = vld [vmem:[#allocation6 + $0xe0] sm:$0xf]
    %v660 = vld [vmem:[#allocation6 + $0xe4] sm:$0xf]
    %v661 = vld [vmem:[#allocation6 + $0xe8] sm:$0xf]
    %v662 = vld [vmem:[#allocation6 + $0xec] sm:$0xf]
    %v663 = vld [vmem:[#allocation6 + $0xf0] sm:$0xf]
    %v664 = vld [vmem:[#allocation6 + $0xf4] sm:$0xf]
    %v665 = vld [vmem:[#allocation6 + $0xf8] sm:$0xf]
    %v666 = vld [vmem:[#allocation6 + $0xfc] sm:$0xf]
    %v667 = vld [vmem:[#allocation6 + $0x100] sm:$0xf]
    %v668 = vld [vmem:[#allocation6 + $0x104] sm:$0xf]
    %v669 = vld [vmem:[#allocation6 + $0x108] sm:$0xf]
    %v670 = vld [vmem:[#allocation6 + $0x10c] sm:$0xf]
    %v671 = vld [vmem:[#allocation6 + $0x110] sm:$0xf]
    %v672 = vld [vmem:[#allocation6 + $0x114] sm:$0xf]
    %v673 = vld [vmem:[#allocation6 + $0x118] sm:$0xf]
    %v674 = vld [vmem:[#allocation6 + $0x11c] sm:$0xf]
    %v675 = vld [vmem:[#allocation6 + $0x120] sm:$0xf]
    %v676 = vld [vmem:[#allocation6 + $0x124] sm:$0xf]
    %v677 = vld [vmem:[#allocation6 + $0x128] sm:$0xf]
    %v678 = vld [vmem:[#allocation6 + $0x12c] sm:$0xf]
    %v679 = vld [vmem:[#allocation6 + $0x130] sm:$0xf]
    %v680 = vld [vmem:[#allocation6 + $0x134] sm:$0xf]
    %v681 = vld [vmem:[#allocation6 + $0x138] sm:$0xf]
    %v682 = vld [vmem:[#allocation6 + $0x13c] sm:$0xf]
    %v683 = vld [vmem:[#allocation6 + $0x140] sm:$0xf]
    %v684 = vld [vmem:[#allocation6 + $0x144] sm:$0xf]
    %v685 = vld [vmem:[#allocation6 + $0x148] sm:$0xf]
    %v686 = vld [vmem:[#allocation6 + $0x14c] sm:$0xf]
    %v687 = vld [vmem:[#allocation6 + $0x150] sm:$0xf]
    %v688 = vld [vmem:[#allocation6 + $0x154] sm:$0xf]
    %v689 = vld [vmem:[#allocation6 + $0x158] sm:$0xf]
    %v690 = vld [vmem:[#allocation6 + $0x15c] sm:$0xf]
    %v691 = vld [vmem:[#allocation6 + $0x160] sm:$0xf]
    %v692 = vld [vmem:[#allocation6 + $0x164] sm:$0xf]
    %v693 = vld [vmem:[#allocation6 + $0x168] sm:$0xf]
    %v694 = vld [vmem:[#allocation6 + $0x16c] sm:$0xf]
    %v695 = vld [vmem:[#allocation6 + $0x170] sm:$0xf]
    %v696 = vld [vmem:[#allocation6 + $0x174] sm:$0xf]
    %v697 = vld [vmem:[#allocation6 + $0x178] sm:$0xf]
    %v698 = vld [vmem:[#allocation6 + $0x17c] sm:$0xf]
    %v699 = vld [vmem:[#allocation6 + $0x180] sm:$0xf]
    %v700 = vld [vmem:[#allocation6 + $0x184] sm:$0xf]
    %v701 = vld [vmem:[#allocation6 + $0x188] sm:$0xf]
    %v702 = vld [vmem:[#allocation6 + $0x18c] sm:$0xf]
    %v703 = vld [vmem:[#allocation6 + $0x190] sm:$0xf]
    %v704 = vld [vmem:[#allocation6 + $0x194] sm:$0xf]
    %v705 = vld [vmem:[#allocation6 + $0x198] sm:$0xf]
    %v706 = vld [vmem:[#allocation6 + $0x19c] sm:$0xf]
    %v707 = vld [vmem:[#allocation6 + $0x1a0] sm:$0xf]
    %v708 = vld [vmem:[#allocation6 + $0x1a4] sm:$0xf]
    %v709 = vld [vmem:[#allocation6 + $0x1a8] sm:$0xf]
    %v710 = vld [vmem:[#allocation6 + $0x1ac] sm:$0xf]
    %v711 = vld [vmem:[#allocation6 + $0x1b0] sm:$0xf]
    %v712 = vld [vmem:[#allocation6 + $0x1b4] sm:$0xf]
    %v713 = vld [vmem:[#allocation6 + $0x1b8] sm:$0xf]
    %v714 = vld [vmem:[#allocation6 + $0x1bc] sm:$0xf]
    %v715 = vld [vmem:[#allocation7 + $0x1] sm:$0x1]
    %v716 = vperm.slane %v715, 0
    %v749 = vunpack.c.l.b16 %v619
    %v750 = vunpack.c.h.b16 %v619
    %v751 = vunpack.c.l.b16 %v620
    %v752 = vunpack.c.h.b16 %v620
    %v753 = vunpack.c.l.b16 %v621
    %v754 = vunpack.c.h.b16 %v621
    %v755 = vunpack.c.l.b16 %v622
    %v756 = vunpack.c.h.b16 %v622
    %v757 = vunpack.c.l.b16 %v623
    %v758 = vunpack.c.h.b16 %v623
    %v759 = vunpack.c.l.b16 %v624
    %v760 = vunpack.c.h.b16 %v624
    %v761 = vunpack.c.l.b16 %v625
    %v762 = vunpack.c.h.b16 %v625
    %v763 = vunpack.c.l.b16 %v626
    %v764 = vunpack.c.h.b16 %v626
    %v765 = vunpack.c.l.b16 %v627
    %v766 = vunpack.c.h.b16 %v627
    %v767 = vunpack.c.l.b16 %v628
    %v768 = vunpack.c.h.b16 %v628
    %v769 = vunpack.c.l.b16 %v629
    %v770 = vunpack.c.h.b16 %v629
    %v771 = vunpack.c.l.b16 %v630
    %v772 = vunpack.c.h.b16 %v630
    %v773 = vunpack.c.l.b16 %v631
    %v774 = vunpack.c.h.b16 %v631
    %v775 = vunpack.c.l.b16 %v632
    %v776 = vunpack.c.h.b16 %v632
    %v777 = vunpack.c.l.b16 %v633
    %v778 = vunpack.c.h.b16 %v633
    %v779 = vunpack.c.l.b16 %v634
    %v780 = vunpack.c.h.b16 %v634
    %v781 = vunpack.c.l.b16 %v635
    %v782 = vunpack.c.h.b16 %v635
    %v783 = vunpack.c.l.b16 %v636
    %v784 = vunpack.c.h.b16 %v636
    %v785 = vunpack.c.l.b16 %v637
    %v786 = vunpack.c.h.b16 %v637
    %v787 = vunpack.c.l.b16 %v638
    %v788 = vunpack.c.h.b16 %v638
    %v789 = vunpack.c.l.b16 %v639
    %v790 = vunpack.c.h.b16 %v639
    %v791 = vunpack.c.l.b16 %v640
    %v792 = vunpack.c.h.b16 %v640
    %v793 = vunpack.c.l.b16 %v641
    %v794 = vunpack.c.h.b16 %v641
    %v795 = vunpack.c.l.b16 %v642
    %v796 = vunpack.c.h.b16 %v642
    %v797 = vunpack.c.l.b16 %v643
    %v798 = vunpack.c.h.b16 %v643
    %v799 = vunpack.c.l.b16 %v644
    %v800 = vunpack.c.h.b16 %v644
    %v801 = vunpack.c.l.b16 %v645
    %v802 = vunpack.c.h.b16 %v645
    %v803 = vunpack.c.l.b16 %v646
    %v804 = vunpack.c.h.b16 %v646
    %v805 = vunpack.c.l.b16 %v647
    %v806 = vunpack.c.h.b16 %v647
    %v807 = vunpack.c.l.b16 %v648
    %v808 = vunpack.c.h.b16 %v648
    %v809 = vunpack.c.l.b16 %v649
    %v810 = vunpack.c.h.b16 %v649
    %v811 = vunpack.c.l.b16 %v650
    %v812 = vunpack.c.h.b16 %v650
    %v813 = vpack.c.b16 %v753, %v749
    %v814 = vpack.c.b16 %v754, %v750
    %v815 = vpack.c.b16 %v755, %v751
    %v816 = vpack.c.b16 %v756, %v752
    %v817 = vpack.c.b16 %v761, %v757
    %v818 = vpack.c.b16 %v762, %v758
    %v819 = vpack.c.b16 %v763, %v759
    %v820 = vpack.c.b16 %v764, %v760
    %v821 = vpack.c.b16 %v769, %v765
    %v822 = vpack.c.b16 %v770, %v766
    %v823 = vpack.c.b16 %v771, %v767
    %v824 = vpack.c.b16 %v772, %v768
    %v825 = vpack.c.b16 %v777, %v773
    %v826 = vpack.c.b16 %v778, %v774
    %v827 = vpack.c.b16 %v779, %v775
    %v828 = vpack.c.b16 %v780, %v776
    %v829 = vpack.c.b16 %v785, %v781
    %v830 = vpack.c.b16 %v786, %v782
    %v831 = vpack.c.b16 %v787, %v783
    %v832 = vpack.c.b16 %v788, %v784
    %v833 = vpack.c.b16 %v793, %v789
    %v834 = vpack.c.b16 %v794, %v790
    %v835 = vpack.c.b16 %v795, %v791
    %v836 = vpack.c.b16 %v796, %v792
    %v837 = vpack.c.b16 %v801, %v797
    %v838 = vpack.c.b16 %v802, %v798
    %v839 = vpack.c.b16 %v803, %v799
    %v840 = vpack.c.b16 %v804, %v800
    %v841 = vpack.c.b16 %v809, %v805
    %v842 = vpack.c.b16 %v810, %v806
    %v843 = vpack.c.b16 %v811, %v807
    %v844 = vpack.c.b16 %v812, %v808
    %v941 = vunpack.c.l.b16 %v651
    %v942 = vunpack.c.l.b16 %v652
    %v943 = vunpack.c.l.b16 %v653
    %v944 = vunpack.c.l.b16 %v654
    %v945 = vunpack.c.l.b16 %v655
    %v946 = vunpack.c.l.b16 %v656
    %v947 = vunpack.c.l.b16 %v657
    %v948 = vunpack.c.l.b16 %v658
    %v949 = vunpack.c.l.b16 %v659
    %v950 = vunpack.c.l.b16 %v660
    %v951 = vunpack.c.l.b16 %v661
    %v952 = vunpack.c.l.b16 %v662
    %v953 = vunpack.c.l.b16 %v663
    %v954 = vunpack.c.l.b16 %v664
    %v955 = vunpack.c.l.b16 %v665
    %v956 = vunpack.c.l.b16 %v666
    %v957 = vunpack.c.l.b16 %v667
    %v958 = vunpack.c.l.b16 %v668
    %v959 = vunpack.c.l.b16 %v669
    %v960 = vunpack.c.l.b16 %v670
    %v961 = vunpack.c.l.b16 %v671
    %v962 = vunpack.c.l.b16 %v672
    %v963 = vunpack.c.l.b16 %v673
    %v964 = vunpack.c.l.b16 %v674
    %v965 = vunpack.c.l.b16 %v675
    %v966 = vunpack.c.l.b16 %v676
    %v967 = vunpack.c.l.b16 %v677
    %v968 = vunpack.c.l.b16 %v678
    %v969 = vunpack.c.l.b16 %v679
    %v970 = vunpack.c.l.b16 %v680
    %v971 = vunpack.c.l.b16 %v681
    %v972 = vunpack.c.l.b16 %v682
    %v973 = vunpack.c.l.b16 %v683
    %v974 = vunpack.c.l.b16 %v684
    %v975 = vunpack.c.l.b16 %v685
    %v976 = vunpack.c.l.b16 %v686
    %v977 = vunpack.c.l.b16 %v687
    %v978 = vunpack.c.l.b16 %v688
    %v979 = vunpack.c.l.b16 %v689
    %v980 = vunpack.c.l.b16 %v690
    %v981 = vunpack.c.l.b16 %v691
    %v982 = vunpack.c.l.b16 %v692
    %v983 = vunpack.c.l.b16 %v693
    %v984 = vunpack.c.l.b16 %v694
    %v985 = vunpack.c.l.b16 %v695
    %v986 = vunpack.c.l.b16 %v696
    %v987 = vunpack.c.l.b16 %v697
    %v988 = vunpack.c.l.b16 %v698
    %v989 = vunpack.c.l.b16 %v699
    %v990 = vunpack.c.l.b16 %v700
    %v991 = vunpack.c.l.b16 %v701
    %v992 = vunpack.c.l.b16 %v702
    %v993 = vunpack.c.l.b16 %v703
    %v994 = vunpack.c.l.b16 %v704
    %v995 = vunpack.c.l.b16 %v705
    %v996 = vunpack.c.l.b16 %v706
    %v997 = vunpack.c.l.b16 %v707
    %v998 = vunpack.c.l.b16 %v708
    %v999 = vunpack.c.l.b16 %v709
    %v1000 = vunpack.c.l.b16 %v710
    %v1001 = vunpack.c.l.b16 %v711
    %v1002 = vunpack.c.l.b16 %v712
    %v1003 = vunpack.c.l.b16 %v713
    %v1004 = vunpack.c.l.b16 %v714
    %v1005 = vpack.c.b16 %v942, %v941
    %v1006 = vpack.c.b16 %v944, %v943
    %v1007 = vpack.c.b16 %v946, %v945
    %v1008 = vpack.c.b16 %v948, %v947
    %v1009 = vpack.c.b16 %v950, %v949
    %v1010 = vpack.c.b16 %v952, %v951
    %v1011 = vpack.c.b16 %v954, %v953
    %v1012 = vpack.c.b16 %v956, %v955
    %v1013 = vpack.c.b16 %v958, %v957
    %v1014 = vpack.c.b16 %v960, %v959
    %v1015 = vpack.c.b16 %v962, %v961
    %v1016 = vpack.c.b16 %v964, %v963
    %v1017 = vpack.c.b16 %v966, %v965
    %v1018 = vpack.c.b16 %v968, %v967
    %v1019 = vpack.c.b16 %v970, %v969
    %v1020 = vpack.c.b16 %v972, %v971
    %v1021 = vpack.c.b16 %v974, %v973
    %v1022 = vpack.c.b16 %v976, %v975
    %v1023 = vpack.c.b16 %v978, %v977
    %v1024 = vpack.c.b16 %v980, %v979
    %v1025 = vpack.c.b16 %v982, %v981
    %v1026 = vpack.c.b16 %v984, %v983
    %v1027 = vpack.c.b16 %v986, %v985
    %v1028 = vpack.c.b16 %v988, %v987
    %v1029 = vpack.c.b16 %v990, %v989
    %v1030 = vpack.c.b16 %v992, %v991
    %v1031 = vpack.c.b16 %v994, %v993
    %v1032 = vpack.c.b16 %v996, %v995
    %v1033 = vpack.c.b16 %v998, %v997
    %v1034 = vpack.c.b16 %v1000, %v999
    %v1035 = vpack.c.b16 %v1002, %v1001
    %v1036 = vpack.c.b16 %v1004, %v1003
    %1069 = vmatpush.bf16.msra.mxu0 %v1012
    %1070 = vmatpush.bf16.msra.mxu0 %v1011
    %1071 = vmatpush.bf16.msra.mxu0 %v1010
    %1072 = vmatpush.bf16.msra.mxu0 %v1009
    %1073 = vmatpush.bf16.msra.mxu0 %v1008
    %1074 = vmatpush.bf16.msra.mxu0 %v1007
    %1075 = vmatpush.bf16.msra.mxu0 %v1006
    %1076 = vmatpush.bf16.msra.mxu0 %v1005
    %1077 = vmatmul.bf16.gmra.mxu0 %v813
    %v1078 = vpop.f32.mrf.mxu0
    %v1079 = vadd.f32 %v716, %v1078
    %v1080 = vpop.f32.mrf.mxu0
    %v1081 = vadd.f32 %v716, %v1080
    %1082 = vmatmul.bf16.gmra.mxu0 %v817
    %v1083 = vpop.f32.mrf.mxu0
    %v1084 = vadd.f32 %v716, %v1083
    %v1085 = vpop.f32.mrf.mxu0
    %v1086 = vadd.f32 %v716, %v1085
    %1087 = vmatmul.bf16.gmra.mxu0 %v821
    %v1088 = vpop.f32.mrf.mxu0
    %v1089 = vadd.f32 %v716, %v1088
    %v1090 = vpop.f32.mrf.mxu0
    %v1091 = vadd.f32 %v716, %v1090
    %1092 = vmatmul.bf16.gmra.mxu0 %v825
    %v1093 = vpop.f32.mrf.mxu0
    %v1094 = vadd.f32 %v716, %v1093
    %v1095 = vpop.f32.mrf.mxu0
    %v1096 = vadd.f32 %v716, %v1095
    %1097 = vmatmul.bf16.gmra.mxu0 %v829
    %v1098 = vpop.f32.mrf.mxu0
    %v1099 = vadd.f32 %v716, %v1098
    %v1100 = vpop.f32.mrf.mxu0
    %v1101 = vadd.f32 %v716, %v1100
    %1102 = vmatmul.bf16.gmra.mxu0 %v833
    %v1103 = vpop.f32.mrf.mxu0
    %v1104 = vadd.f32 %v716, %v1103
    %v1105 = vpop.f32.mrf.mxu0
    %v1106 = vadd.f32 %v716, %v1105
    %1107 = vmatmul.bf16.gmra.mxu0 %v837
    %v1108 = vpop.f32.mrf.mxu0
    %v1109 = vadd.f32 %v716, %v1108
    %v1110 = vpop.f32.mrf.mxu0
    %v1111 = vadd.f32 %v716, %v1110
    %1112 = vmatmul.bf16.gmra.mxu0 %v841
    %v1113 = vpop.f32.mrf.mxu0
    %v1114 = vadd.f32 %v716, %v1113
    %v1115 = vpop.f32.mrf.mxu0
    %v1116 = vadd.f32 %v716, %v1115
    %1117 = vdwg.mxu0
    %1118 = vmatpush.bf16.msra.mxu0 %v1020
    %1119 = vmatpush.bf16.msra.mxu0 %v1019
    %1120 = vmatpush.bf16.msra.mxu0 %v1018
    %1121 = vmatpush.bf16.msra.mxu0 %v1017
    %1122 = vmatpush.bf16.msra.mxu0 %v1016
    %1123 = vmatpush.bf16.msra.mxu0 %v1015
    %1124 = vmatpush.bf16.msra.mxu0 %v1014
    %1125 = vmatpush.bf16.msra.mxu0 %v1013
    %1126 = vmatmul.bf16.gmra.mxu0 %v814
    %v1127 = vpop.f32.mrf.mxu0
    %v1128 = vadd.f32 %v1079, %v1127
    %v1129 = vpop.f32.mrf.mxu0
    %v1130 = vadd.f32 %v1081, %v1129
    %1131 = vmatmul.bf16.gmra.mxu0 %v818
    %v1132 = vpop.f32.mrf.mxu0
    %v1133 = vadd.f32 %v1084, %v1132
    %v1134 = vpop.f32.mrf.mxu0
    %v1135 = vadd.f32 %v1086, %v1134
    %1136 = vmatmul.bf16.gmra.mxu0 %v822
    %v1137 = vpop.f32.mrf.mxu0
    %v1138 = vadd.f32 %v1089, %v1137
    %v1139 = vpop.f32.mrf.mxu0
    %v1140 = vadd.f32 %v1091, %v1139
    %1141 = vmatmul.bf16.gmra.mxu0 %v826
    %v1142 = vpop.f32.mrf.mxu0
    %v1143 = vadd.f32 %v1094, %v1142
    %v1144 = vpop.f32.mrf.mxu0
    %v1145 = vadd.f32 %v1096, %v1144
    %1146 = vmatmul.bf16.gmra.mxu0 %v830
    %v1147 = vpop.f32.mrf.mxu0
    %v1148 = vadd.f32 %v1099, %v1147
    %v1149 = vpop.f32.mrf.mxu0
    %v1150 = vadd.f32 %v1101, %v1149
    %1151 = vmatmul.bf16.gmra.mxu0 %v834
    %v1152 = vpop.f32.mrf.mxu0
    %v1153 = vadd.f32 %v1104, %v1152
    %v1154 = vpop.f32.mrf.mxu0
    %v1155 = vadd.f32 %v1106, %v1154
    %1156 = vmatmul.bf16.gmra.mxu0 %v838
    %v1157 = vpop.f32.mrf.mxu0
    %v1158 = vadd.f32 %v1109, %v1157
    %v1159 = vpop.f32.mrf.mxu0
    %v1160 = vadd.f32 %v1111, %v1159
    %1161 = vmatmul.bf16.gmra.mxu0 %v842
    %v1162 = vpop.f32.mrf.mxu0
    %v1163 = vadd.f32 %v1114, %v1162
    %v1164 = vpop.f32.mrf.mxu0
    %v1165 = vadd.f32 %v1116, %v1164
    %1166 = vdwg.mxu0
    %1167 = vmatpush.bf16.msra.mxu0 %v1028
    %1168 = vmatpush.bf16.msra.mxu0 %v1027
    %1169 = vmatpush.bf16.msra.mxu0 %v1026
    %1170 = vmatpush.bf16.msra.mxu0 %v1025
    %1171 = vmatpush.bf16.msra.mxu0 %v1024
    %1172 = vmatpush.bf16.msra.mxu0 %v1023
    %1173 = vmatpush.bf16.msra.mxu0 %v1022
    %1174 = vmatpush.bf16.msra.mxu0 %v1021
    %1175 = vmatmul.bf16.gmra.mxu0 %v815
    %v1176 = vpop.f32.mrf.mxu0
    %v1177 = vadd.f32 %v1128, %v1176
    %v1178 = vpop.f32.mrf.mxu0
    %v1179 = vadd.f32 %v1130, %v1178
    %1180 = vmatmul.bf16.gmra.mxu0 %v819
    %v1181 = vpop.f32.mrf.mxu0
    %v1182 = vadd.f32 %v1133, %v1181
    %v1183 = vpop.f32.mrf.mxu0
    %v1184 = vadd.f32 %v1135, %v1183
    %1185 = vmatmul.bf16.gmra.mxu0 %v823
    %v1186 = vpop.f32.mrf.mxu0
    %v1187 = vadd.f32 %v1138, %v1186
    %v1188 = vpop.f32.mrf.mxu0
    %v1189 = vadd.f32 %v1140, %v1188
    %1190 = vmatmul.bf16.gmra.mxu0 %v827
    %v1191 = vpop.f32.mrf.mxu0
    %v1192 = vadd.f32 %v1143, %v1191
    %v1193 = vpop.f32.mrf.mxu0
    %v1194 = vadd.f32 %v1145, %v1193
    %1195 = vmatmul.bf16.gmra.mxu0 %v831
    %v1196 = vpop.f32.mrf.mxu0
    %v1197 = vadd.f32 %v1148, %v1196
    %v1198 = vpop.f32.mrf.mxu0
    %v1199 = vadd.f32 %v1150, %v1198
    %1200 = vmatmul.bf16.gmra.mxu0 %v835
    %v1201 = vpop.f32.mrf.mxu0
    %v1202 = vadd.f32 %v1153, %v1201
    %v1203 = vpop.f32.mrf.mxu0
    %v1204 = vadd.f32 %v1155, %v1203
    %1205 = vmatmul.bf16.gmra.mxu0 %v839
    %v1206 = vpop.f32.mrf.mxu0
    %v1207 = vadd.f32 %v1158, %v1206
    %v1208 = vpop.f32.mrf.mxu0
    %v1209 = vadd.f32 %v1160, %v1208
    %1210 = vmatmul.bf16.gmra.mxu0 %v843
    %v1211 = vpop.f32.mrf.mxu0
    %v1212 = vadd.f32 %v1163, %v1211
    %v1213 = vpop.f32.mrf.mxu0
    %v1214 = vadd.f32 %v1165, %v1213
    %1215 = vdwg.mxu0
    %1216 = vmatpush.bf16.msra.mxu0 %v1036
    %1217 = vmatpush.bf16.msra.mxu0 %v1035
    %1218 = vmatpush.bf16.msra.mxu0 %v1034
    %1219 = vmatpush.bf16.msra.mxu0 %v1033
    %1220 = vmatpush.bf16.msra.mxu0 %v1032
    %1221 = vmatpush.bf16.msra.mxu0 %v1031
    %1222 = vmatpush.bf16.msra.mxu0 %v1030
    %1223 = vmatpush.bf16.msra.mxu0 %v1029
    %1224 = vmatmul.bf16.gmra.mxu0 %v816
    %v1225 = vpop.f32.mrf.mxu0
    %v1226 = vadd.f32 %v1177, %v1225
    %v1227 = vpop.f32.mrf.mxu0
    %v1228 = vadd.f32 %v1179, %v1227
    %1229 = vmatmul.bf16.gmra.mxu0 %v820
    %v1230 = vpop.f32.mrf.mxu0
    %v1231 = vadd.f32 %v1182, %v1230
    %v1232 = vpop.f32.mrf.mxu0
    %v1233 = vadd.f32 %v1184, %v1232
    %1234 = vmatmul.bf16.gmra.mxu0 %v824
    %v1235 = vpop.f32.mrf.mxu0
    %v1236 = vadd.f32 %v1187, %v1235
    %v1237 = vpop.f32.mrf.mxu0
    %v1238 = vadd.f32 %v1189, %v1237
    %1239 = vmatmul.bf16.gmra.mxu0 %v828
    %v1240 = vpop.f32.mrf.mxu0
    %v1241 = vadd.f32 %v1192, %v1240
    %v1242 = vpop.f32.mrf.mxu0
    %v1243 = vadd.f32 %v1194, %v1242
    %1244 = vmatmul.bf16.gmra.mxu0 %v832
    %v1245 = vpop.f32.mrf.mxu0
    %v1246 = vadd.f32 %v1197, %v1245
    %v1247 = vpop.f32.mrf.mxu0
    %v1248 = vadd.f32 %v1199, %v1247
    %1249 = vmatmul.bf16.gmra.mxu0 %v836
    %v1250 = vpop.f32.mrf.mxu0
    %v1251 = vadd.f32 %v1202, %v1250
    %v1252 = vpop.f32.mrf.mxu0
    %v1253 = vadd.f32 %v1204, %v1252
    %1254 = vmatmul.bf16.gmra.mxu0 %v840
    %v1255 = vpop.f32.mrf.mxu0
    %v1256 = vadd.f32 %v1207, %v1255
    %v1257 = vpop.f32.mrf.mxu0
    %v1258 = vadd.f32 %v1209, %v1257
    %1259 = vmatmul.bf16.gmra.mxu0 %v844
    %v1260 = vpop.f32.mrf.mxu0
    %v1261 = vadd.f32 %v1212, %v1260
    %v1262 = vpop.f32.mrf.mxu0
    %v1263 = vadd.f32 %v1214, %v1262
    %1264 = vdwg.mxu0
    %v1265 = vmul.f32 %v1226, 0.2
    %v1266 = vmul.f32 %v1228, 0.2
    %v1267 = vmul.f32 %v1231, 0.2
    %v1268 = vmul.f32 %v1233, 0.2
    %v1269 = vmul.f32 %v1236, 0.2
    %v1270 = vmul.f32 %v1238, 0.2
    %v1271 = vmul.f32 %v1241, 0.2
    %v1272 = vmul.f32 %v1243, 0.2
    %v1273 = vmul.f32 %v1246, 0.2
    %v1274 = vmul.f32 %v1248, 0.2
    %v1275 = vmul.f32 %v1251, 0.2
    %v1276 = vmul.f32 %v1253, 0.2
    %v1277 = vmul.f32 %v1256, 0.2
    %v1278 = vmul.f32 %v1258, 0.2
    %v1279 = vmul.f32 %v1261, 0.2
    %v1280 = vmul.f32 %v1263, 0.2
    %v1281 = vmax.f32 %v1226, %v1265
    %v1282 = vmax.f32 %v1228, %v1266
    %v1283 = vmax.f32 %v1231, %v1267
    %v1284 = vmax.f32 %v1233, %v1268
    %v1285 = vmax.f32 %v1236, %v1269
    %v1286 = vmax.f32 %v1238, %v1270
    %v1287 = vmax.f32 %v1241, %v1271
    %v1288 = vmax.f32 %v1243, %v1272
    %v1289 = vmax.f32 %v1246, %v1273
    %v1290 = vmax.f32 %v1248, %v1274
    %v1291 = vmax.f32 %v1251, %v1275
    %v1292 = vmax.f32 %v1253, %v1276
    %v1293 = vmax.f32 %v1256, %v1277
    %v1294 = vmax.f32 %v1258, %v1278
    %v1295 = vmax.f32 %v1261, %v1279
    %v1296 = vmax.f32 %v1263, %v1280
    %v1297 = vpack.c.bf16 %v1282, %v1281
    %v1298 = vpack.c.bf16 %v1284, %v1283
    %v1299 = vpack.c.bf16 %v1286, %v1285
    %v1300 = vpack.c.bf16 %v1288, %v1287
    %v1301 = vpack.c.bf16 %v1290, %v1289
    %v1302 = vpack.c.bf16 %v1292, %v1291
    %v1303 = vpack.c.bf16 %v1294, %v1293
    %v1304 = vpack.c.bf16 %v1296, %v1295
    %v1305 = vld [vmem:[#allocation6 + $0x1c0] sm:$0xf]
    %v1306 = vld [vmem:[#allocation6 + $0x1c4] sm:$0xf]
    %v1307 = vld [vmem:[#allocation6 + $0x1c8] sm:$0xf]
    %v1308 = vld [vmem:[#allocation6 + $0x1cc] sm:$0xf]
    %v1309 = vld [vmem:[#allocation6 + $0x1d0] sm:$0xf]
    %v1310 = vld [vmem:[#allocation6 + $0x1d4] sm:$0xf]
    %v1311 = vld [vmem:[#allocation6 + $0x1d8] sm:$0xf]
    %v1312 = vld [vmem:[#allocation6 + $0x1dc] sm:$0xf]
    %v1313 = vld [vmem:[#allocation6 + $0x1e0] sm:$0xf]
    %v1314 = vld [vmem:[#allocation6 + $0x1e4] sm:$0xf]
    %v1315 = vld [vmem:[#allocation6 + $0x1e8] sm:$0xf]
    %v1316 = vld [vmem:[#allocation6 + $0x1ec] sm:$0xf]
    %v1317 = vld [vmem:[#allocation6 + $0x1f0] sm:$0xf]
    %v1318 = vld [vmem:[#allocation6 + $0x1f4] sm:$0xf]
    %v1319 = vld [vmem:[#allocation6 + $0x1f8] sm:$0xf]
    %v1320 = vld [vmem:[#allocation6 + $0x1fc] sm:$0xf]
    %v1321 = vld [vmem:[#allocation6 + $0x200] sm:$0xf]
    %v1322 = vld [vmem:[#allocation6 + $0x204] sm:$0xf]
    %v1323 = vld [vmem:[#allocation6 + $0x208] sm:$0xf]
    %v1324 = vld [vmem:[#allocation6 + $0x20c] sm:$0xf]
    %v1325 = vld [vmem:[#allocation6 + $0x210] sm:$0xf]
    %v1326 = vld [vmem:[#allocation6 + $0x214] sm:$0xf]
    %v1327 = vld [vmem:[#allocation6 + $0x218] sm:$0xf]
    %v1328 = vld [vmem:[#allocation6 + $0x21c] sm:$0xf]
    %v1329 = vld [vmem:[#allocation6 + $0x220] sm:$0xf]
    %v1330 = vld [vmem:[#allocation6 + $0x224] sm:$0xf]
    %v1331 = vld [vmem:[#allocation6 + $0x228] sm:$0xf]
    %v1332 = vld [vmem:[#allocation6 + $0x22c] sm:$0xf]
    %v1333 = vld [vmem:[#allocation6 + $0x230] sm:$0xf]
    %v1334 = vld [vmem:[#allocation6 + $0x234] sm:$0xf]
    %v1335 = vld [vmem:[#allocation6 + $0x238] sm:$0xf]
    %v1336 = vld [vmem:[#allocation6 + $0x23c] sm:$0xf]
    %v1353 = vunpack.c.l.b16 %v1321
    %v1354 = vunpack.c.l.b16 %v1322
    %v1355 = vunpack.c.l.b16 %v1323
    %v1356 = vunpack.c.l.b16 %v1324
    %v1357 = vunpack.c.l.b16 %v1325
    %v1358 = vunpack.c.l.b16 %v1326
    %v1359 = vunpack.c.l.b16 %v1327
    %v1360 = vunpack.c.l.b16 %v1328
    %v1361 = vunpack.c.l.b16 %v1329
    %v1362 = vunpack.c.l.b16 %v1330
    %v1363 = vunpack.c.l.b16 %v1331
    %v1364 = vunpack.c.l.b16 %v1332
    %v1365 = vunpack.c.l.b16 %v1333
    %v1366 = vunpack.c.l.b16 %v1334
    %v1367 = vunpack.c.l.b16 %v1335
    %v1368 = vunpack.c.l.b16 %v1336
    %v1369 = vpack.c.b16 %v1354, %v1353
    %v1370 = vpack.c.b16 %v1356, %v1355
    %v1371 = vpack.c.b16 %v1358, %v1357
    %v1372 = vpack.c.b16 %v1360, %v1359
    %v1373 = vpack.c.b16 %v1362, %v1361
    %v1374 = vpack.c.b16 %v1364, %v1363
    %v1375 = vpack.c.b16 %v1366, %v1365
    %v1376 = vpack.c.b16 %v1368, %v1367
    %1385 = vmatpush.bf16.msra.mxu0 %v1376
    %1386 = vmatpush.bf16.msra.mxu0 %v1375
    %1387 = vmatpush.bf16.msra.mxu0 %v1374
    %1388 = vmatpush.bf16.msra.mxu0 %v1373
    %1389 = vmatpush.bf16.msra.mxu0 %v1372
    %1390 = vmatpush.bf16.msra.mxu0 %v1371
    %1391 = vmatpush.bf16.msra.mxu0 %v1370
    %1392 = vmatpush.bf16.msra.mxu0 %v1369
    %1393 = vmatmul.bf16.gmra.mxu0 %v1297
    %v1394 = vpop.f32.mrf.mxu0
    %v1395 = vadd.f32 0.0, %v1394
    %v1396 = vpop.f32.mrf.mxu0
    %v1397 = vadd.f32 0.0, %v1396
    %1398 = vmatmul.bf16.gmra.mxu0 %v1298
    %v1399 = vpop.f32.mrf.mxu0
    %v1400 = vadd.f32 0.0, %v1399
    %v1401 = vpop.f32.mrf.mxu0
    %v1402 = vadd.f32 0.0, %v1401
    %1403 = vmatmul.bf16.gmra.mxu0 %v1299
    %v1404 = vpop.f32.mrf.mxu0
    %v1405 = vadd.f32 0.0, %v1404
    %v1406 = vpop.f32.mrf.mxu0
    %v1407 = vadd.f32 0.0, %v1406
    %1408 = vmatmul.bf16.gmra.mxu0 %v1300
    %v1409 = vpop.f32.mrf.mxu0
    %v1410 = vadd.f32 0.0, %v1409
    %v1411 = vpop.f32.mrf.mxu0
    %v1412 = vadd.f32 0.0, %v1411
    %1413 = vmatmul.bf16.gmra.mxu0 %v1301
    %v1414 = vpop.f32.mrf.mxu0
    %v1415 = vadd.f32 0.0, %v1414
    %v1416 = vpop.f32.mrf.mxu0
    %v1417 = vadd.f32 0.0, %v1416
    %1418 = vmatmul.bf16.gmra.mxu0 %v1302
    %v1419 = vpop.f32.mrf.mxu0
    %v1420 = vadd.f32 0.0, %v1419
    %v1421 = vpop.f32.mrf.mxu0
    %v1422 = vadd.f32 0.0, %v1421
    %1423 = vmatmul.bf16.gmra.mxu0 %v1303
    %v1424 = vpop.f32.mrf.mxu0
    %v1425 = vadd.f32 0.0, %v1424
    %v1426 = vpop.f32.mrf.mxu0
    %v1427 = vadd.f32 0.0, %v1426
    %1428 = vmatmul.bf16.gmra.mxu0 %v1304
    %v1429 = vpop.f32.mrf.mxu0
    %v1430 = vadd.f32 0.0, %v1429
    %v1431 = vpop.f32.mrf.mxu0
    %v1432 = vadd.f32 0.0, %v1431
    %1433 = vdwg.mxu0
    %v1450 = vunpack.c.l.b16 %v1305
    %v1451 = vunpack.c.l.b16 %v1306
    %v1452 = vunpack.c.l.b16 %v1307
    %v1453 = vunpack.c.l.b16 %v1308
    %v1454 = vunpack.c.l.b16 %v1309
    %v1455 = vunpack.c.l.b16 %v1310
    %v1456 = vunpack.c.l.b16 %v1311
    %v1457 = vunpack.c.l.b16 %v1312
    %v1458 = vunpack.c.l.b16 %v1313
    %v1459 = vunpack.c.l.b16 %v1314
    %v1460 = vunpack.c.l.b16 %v1315
    %v1461 = vunpack.c.l.b16 %v1316
    %v1462 = vunpack.c.l.b16 %v1317
    %v1463 = vunpack.c.l.b16 %v1318
    %v1464 = vunpack.c.l.b16 %v1319
    %v1465 = vunpack.c.l.b16 %v1320
    %v1466 = vpack.c.b16 %v1451, %v1450
    %v1467 = vpack.c.b16 %v1453, %v1452
    %v1468 = vpack.c.b16 %v1455, %v1454
    %v1469 = vpack.c.b16 %v1457, %v1456
    %v1470 = vpack.c.b16 %v1459, %v1458
    %v1471 = vpack.c.b16 %v1461, %v1460
    %v1472 = vpack.c.b16 %v1463, %v1462
    %v1473 = vpack.c.b16 %v1465, %v1464
    %1482 = vmatpush.bf16.msra.mxu0 %v1473
    %1483 = vmatpush.bf16.msra.mxu0 %v1472
    %1484 = vmatpush.bf16.msra.mxu0 %v1471
    %1485 = vmatpush.bf16.msra.mxu0 %v1470
    %1486 = vmatpush.bf16.msra.mxu0 %v1469
    %1487 = vmatpush.bf16.msra.mxu0 %v1468
    %1488 = vmatpush.bf16.msra.mxu0 %v1467
    %1489 = vmatpush.bf16.msra.mxu0 %v1466
    %1490 = vmatmul.bf16.gmra.mxu0 %v611
    %v1491 = vpop.f32.mrf.mxu0
    %v1492 = vadd.f32 %v1395, %v1491
    %v1493 = vpop.f32.mrf.mxu0
    %v1494 = vadd.f32 %v1397, %v1493
    %1495 = vmatmul.bf16.gmra.mxu0 %v612
    %v1496 = vpop.f32.mrf.mxu0
    %v1497 = vadd.f32 %v1400, %v1496
    %v1498 = vpop.f32.mrf.mxu0
    %v1499 = vadd.f32 %v1402, %v1498
    %1500 = vmatmul.bf16.gmra.mxu0 %v613
    %v1501 = vpop.f32.mrf.mxu0
    %v1502 = vadd.f32 %v1405, %v1501
    %v1503 = vpop.f32.mrf.mxu0
    %v1504 = vadd.f32 %v1407, %v1503
    %1505 = vmatmul.bf16.gmra.mxu0 %v614
    %v1506 = vpop.f32.mrf.mxu0
    %v1507 = vadd.f32 %v1410, %v1506
    %v1508 = vpop.f32.mrf.mxu0
    %v1509 = vadd.f32 %v1412, %v1508
    %1510 = vmatmul.bf16.gmra.mxu0 %v615
    %v1511 = vpop.f32.mrf.mxu0
    %v1512 = vadd.f32 %v1415, %v1511
    %v1513 = vpop.f32.mrf.mxu0
    %v1514 = vadd.f32 %v1417, %v1513
    %1515 = vmatmul.bf16.gmra.mxu0 %v616
    %v1516 = vpop.f32.mrf.mxu0
    %v1517 = vadd.f32 %v1420, %v1516
    %v1518 = vpop.f32.mrf.mxu0
    %v1519 = vadd.f32 %v1422, %v1518
    %1520 = vmatmul.bf16.gmra.mxu0 %v617
    %v1521 = vpop.f32.mrf.mxu0
    %v1522 = vadd.f32 %v1425, %v1521
    %v1523 = vpop.f32.mrf.mxu0
    %v1524 = vadd.f32 %v1427, %v1523
    %1525 = vmatmul.bf16.gmra.mxu0 %v618
    %v1526 = vpop.f32.mrf.mxu0
    %v1527 = vadd.f32 %v1430, %v1526
    %v1528 = vpop.f32.mrf.mxu0
    %v1529 = vadd.f32 %v1432, %v1528
    %1530 = vdwg.mxu0
    %v1531 = vld [vmem:[#allocation7 + $0x2] sm:$0x1]
    %v1532 = vperm.slane %v1531, 0
    %v1533 = vadd.f32 %v1492, %v1532
    %v1534 = vadd.f32 %v1494, %v1532
    %v1535 = vadd.f32 %v1497, %v1532
    %v1536 = vadd.f32 %v1499, %v1532
    %v1537 = vadd.f32 %v1502, %v1532
    %v1538 = vadd.f32 %v1504, %v1532
    %v1539 = vadd.f32 %v1507, %v1532
    %v1540 = vadd.f32 %v1509, %v1532
    %v1541 = vadd.f32 %v1512, %v1532
    %v1542 = vadd.f32 %v1514, %v1532
    %v1543 = vadd.f32 %v1517, %v1532
    %v1544 = vadd.f32 %v1519, %v1532
    %v1545 = vadd.f32 %v1522, %v1532
    %v1546 = vadd.f32 %v1524, %v1532
    %v1547 = vadd.f32 %v1527, %v1532
    %v1548 = vadd.f32 %v1529, %v1532
    %v1549 = vmul.f32 %v1533, 0.2
    %v1550 = vmul.f32 %v1534, 0.2
    %v1551 = vmul.f32 %v1535, 0.2
    %v1552 = vmul.f32 %v1536, 0.2
    %v1553 = vmul.f32 %v1537, 0.2
    %v1554 = vmul.f32 %v1538, 0.2
    %v1555 = vmul.f32 %v1539, 0.2
    %v1556 = vmul.f32 %v1540, 0.2
    %v1557 = vmul.f32 %v1541, 0.2
    %v1558 = vmul.f32 %v1542, 0.2
    %v1559 = vmul.f32 %v1543, 0.2
    %v1560 = vmul.f32 %v1544, 0.2
    %v1561 = vmul.f32 %v1545, 0.2
    %v1562 = vmul.f32 %v1546, 0.2
    %v1563 = vmul.f32 %v1547, 0.2
    %v1564 = vmul.f32 %v1548, 0.2
    %v1565 = vmax.f32 %v1533, %v1549
    %v1566 = vmax.f32 %v1534, %v1550
    %v1567 = vmax.f32 %v1535, %v1551
    %v1568 = vmax.f32 %v1536, %v1552
    %v1569 = vmax.f32 %v1537, %v1553
    %v1570 = vmax.f32 %v1538, %v1554
    %v1571 = vmax.f32 %v1539, %v1555
    %v1572 = vmax.f32 %v1540, %v1556
    %v1573 = vmax.f32 %v1541, %v1557
    %v1574 = vmax.f32 %v1542, %v1558
    %v1575 = vmax.f32 %v1543, %v1559
    %v1576 = vmax.f32 %v1544, %v1560
    %v1577 = vmax.f32 %v1545, %v1561
    %v1578 = vmax.f32 %v1546, %v1562
    %v1579 = vmax.f32 %v1547, %v1563
    %v1580 = vmax.f32 %v1548, %v1564
    %v1581 = vpack.c.bf16 %v1566, %v1565
    %v1582 = vpack.c.bf16 %v1568, %v1567
    %v1583 = vpack.c.bf16 %v1570, %v1569
    %v1584 = vpack.c.bf16 %v1572, %v1571
    %v1585 = vpack.c.bf16 %v1574, %v1573
    %v1586 = vpack.c.bf16 %v1576, %v1575
    %v1587 = vpack.c.bf16 %v1578, %v1577
    %v1588 = vpack.c.bf16 %v1580, %v1579
    %v1589 = vld [vmem:[#allocation6 + $0x240] sm:$0xf]
    %v1590 = vld [vmem:[#allocation6 + $0x244] sm:$0xf]
    %v1591 = vld [vmem:[#allocation6 + $0x248] sm:$0xf]
    %v1592 = vld [vmem:[#allocation6 + $0x24c] sm:$0xf]
    %v1593 = vld [vmem:[#allocation6 + $0x250] sm:$0xf]
    %v1594 = vld [vmem:[#allocation6 + $0x254] sm:$0xf]
    %v1595 = vld [vmem:[#allocation6 + $0x258] sm:$0xf]
    %v1596 = vld [vmem:[#allocation6 + $0x25c] sm:$0xf]
    %v1597 = vld [vmem:[#allocation6 + $0x260] sm:$0xf]
    %v1598 = vld [vmem:[#allocation6 + $0x264] sm:$0xf]
    %v1599 = vld [vmem:[#allocation6 + $0x268] sm:$0xf]
    %v1600 = vld [vmem:[#allocation6 + $0x26c] sm:$0xf]
    %v1601 = vld [vmem:[#allocation6 + $0x270] sm:$0xf]
    %v1602 = vld [vmem:[#allocation6 + $0x274] sm:$0xf]
    %v1603 = vld [vmem:[#allocation6 + $0x278] sm:$0xf]
    %v1604 = vld [vmem:[#allocation6 + $0x27c] sm:$0xf]
    %v1605 = vld [vmem:[#allocation7 + $0x3] sm:$0x1]
    %v1606 = vperm.slane %v1605, 0
    %v1623 = vunpack.c.l.b16 %v1589
    %v1624 = vunpack.c.l.b16 %v1590
    %v1625 = vunpack.c.l.b16 %v1591
    %v1626 = vunpack.c.l.b16 %v1592
    %v1627 = vunpack.c.l.b16 %v1593
    %v1628 = vunpack.c.l.b16 %v1594
    %v1629 = vunpack.c.l.b16 %v1595
    %v1630 = vunpack.c.l.b16 %v1596
    %v1631 = vunpack.c.l.b16 %v1597
    %v1632 = vunpack.c.l.b16 %v1598
    %v1633 = vunpack.c.l.b16 %v1599
    %v1634 = vunpack.c.l.b16 %v1600
    %v1635 = vunpack.c.l.b16 %v1601
    %v1636 = vunpack.c.l.b16 %v1602
    %v1637 = vunpack.c.l.b16 %v1603
    %v1638 = vunpack.c.l.b16 %v1604
    %v1639 = vpack.c.b16 %v1624, %v1623
    %v1640 = vpack.c.b16 %v1626, %v1625
    %v1641 = vpack.c.b16 %v1628, %v1627
    %v1642 = vpack.c.b16 %v1630, %v1629
    %v1643 = vpack.c.b16 %v1632, %v1631
    %v1644 = vpack.c.b16 %v1634, %v1633
    %v1645 = vpack.c.b16 %v1636, %v1635
    %v1646 = vpack.c.b16 %v1638, %v1637
    %1655 = vmatpush.bf16.msra.mxu0 %v1646
    %1656 = vmatpush.bf16.msra.mxu0 %v1645
    %1657 = vmatpush.bf16.msra.mxu0 %v1644
    %1658 = vmatpush.bf16.msra.mxu0 %v1643
    %1659 = vmatpush.bf16.msra.mxu0 %v1642
    %1660 = vmatpush.bf16.msra.mxu0 %v1641
    %1661 = vmatpush.bf16.msra.mxu0 %v1640
    %1662 = vmatpush.bf16.msra.mxu0 %v1639
    %1663 = vmatmul.bf16.gmra.mxu0 %v1581
    %v1664 = vpop.f32.mrf.mxu0
    %v1665 = vadd.f32 %v1606, %v1664
    %v1666 = vpop.f32.mrf.mxu0
    %v1667 = vadd.f32 %v1606, %v1666
    %1668 = vmatmul.bf16.gmra.mxu0 %v1582
    %v1669 = vpop.f32.mrf.mxu0
    %v1670 = vadd.f32 %v1606, %v1669
    %v1671 = vpop.f32.mrf.mxu0
    %v1672 = vadd.f32 %v1606, %v1671
    %1673 = vmatmul.bf16.gmra.mxu0 %v1583
    %v1674 = vpop.f32.mrf.mxu0
    %v1675 = vadd.f32 %v1606, %v1674
    %v1676 = vpop.f32.mrf.mxu0
    %v1677 = vadd.f32 %v1606, %v1676
    %1678 = vmatmul.bf16.gmra.mxu0 %v1584
    %v1679 = vpop.f32.mrf.mxu0
    %v1680 = vadd.f32 %v1606, %v1679
    %v1681 = vpop.f32.mrf.mxu0
    %v1682 = vadd.f32 %v1606, %v1681
    %1683 = vmatmul.bf16.gmra.mxu0 %v1585
    %v1684 = vpop.f32.mrf.mxu0
    %v1685 = vadd.f32 %v1606, %v1684
    %v1686 = vpop.f32.mrf.mxu0
    %v1687 = vadd.f32 %v1606, %v1686
    %1688 = vmatmul.bf16.gmra.mxu0 %v1586
    %v1689 = vpop.f32.mrf.mxu0
    %v1690 = vadd.f32 %v1606, %v1689
    %v1691 = vpop.f32.mrf.mxu0
    %v1692 = vadd.f32 %v1606, %v1691
    %1693 = vmatmul.bf16.gmra.mxu0 %v1587
    %v1694 = vpop.f32.mrf.mxu0
    %v1695 = vadd.f32 %v1606, %v1694
    %v1696 = vpop.f32.mrf.mxu0
    %v1697 = vadd.f32 %v1606, %v1696
    %1698 = vmatmul.bf16.gmra.mxu0 %v1588
    %v1699 = vpop.f32.mrf.mxu0
    %v1700 = vadd.f32 %v1606, %v1699
    %v1701 = vpop.f32.mrf.mxu0
    %v1702 = vadd.f32 %v1606, %v1701
    %1703 = vdwg.mxu0
    %v1704 = vmul.f32 %v1665, 0.2
    %v1705 = vmul.f32 %v1667, 0.2
    %v1706 = vmul.f32 %v1670, 0.2
    %v1707 = vmul.f32 %v1672, 0.2
    %v1708 = vmul.f32 %v1675, 0.2
    %v1709 = vmul.f32 %v1677, 0.2
    %v1710 = vmul.f32 %v1680, 0.2
    %v1711 = vmul.f32 %v1682, 0.2
    %v1712 = vmul.f32 %v1685, 0.2
    %v1713 = vmul.f32 %v1687, 0.2
    %v1714 = vmul.f32 %v1690, 0.2
    %v1715 = vmul.f32 %v1692, 0.2
    %v1716 = vmul.f32 %v1695, 0.2
    %v1717 = vmul.f32 %v1697, 0.2
    %v1718 = vmul.f32 %v1700, 0.2
    %v1719 = vmul.f32 %v1702, 0.2
    %v1720 = vmax.f32 %v1665, %v1704
    %v1721 = vmax.f32 %v1667, %v1705
    %v1722 = vmax.f32 %v1670, %v1706
    %v1723 = vmax.f32 %v1672, %v1707
    %v1724 = vmax.f32 %v1675, %v1708
    %v1725 = vmax.f32 %v1677, %v1709
    %v1726 = vmax.f32 %v1680, %v1710
    %v1727 = vmax.f32 %v1682, %v1711
    %v1728 = vmax.f32 %v1685, %v1712
    %v1729 = vmax.f32 %v1687, %v1713
    %v1730 = vmax.f32 %v1690, %v1714
    %v1731 = vmax.f32 %v1692, %v1715
    %v1732 = vmax.f32 %v1695, %v1716
    %v1733 = vmax.f32 %v1697, %v1717
    %v1734 = vmax.f32 %v1700, %v1718
    %v1735 = vmax.f32 %v1702, %v1719
    %v1736 = vpack.c.bf16 %v1721, %v1720
    %v1737 = vpack.c.bf16 %v1723, %v1722
    %v1738 = vpack.c.bf16 %v1725, %v1724
    %v1739 = vpack.c.bf16 %v1727, %v1726
    %v1740 = vpack.c.bf16 %v1729, %v1728
    %v1741 = vpack.c.bf16 %v1731, %v1730
    %v1742 = vpack.c.bf16 %v1733, %v1732
    %v1743 = vpack.c.bf16 %v1735, %v1734
    %v1744 = vld [vmem:[#allocation6 + $0x280] sm:$0xf]
    %v1745 = vld [vmem:[#allocation6 + $0x284] sm:$0xf]
    %v1746 = vld [vmem:[#allocation6 + $0x288] sm:$0xf]
    %v1747 = vld [vmem:[#allocation6 + $0x28c] sm:$0xf]
    %v1748 = vld [vmem:[#allocation6 + $0x290] sm:$0xf]
    %v1749 = vld [vmem:[#allocation6 + $0x294] sm:$0xf]
    %v1750 = vld [vmem:[#allocation6 + $0x298] sm:$0xf]
    %v1751 = vld [vmem:[#allocation6 + $0x29c] sm:$0xf]
    %v1752 = vld [vmem:[#allocation6 + $0x2a0] sm:$0xf]
    %v1753 = vld [vmem:[#allocation6 + $0x2a4] sm:$0xf]
    %v1754 = vld [vmem:[#allocation6 + $0x2a8] sm:$0xf]
    %v1755 = vld [vmem:[#allocation6 + $0x2ac] sm:$0xf]
    %v1756 = vld [vmem:[#allocation6 + $0x2b0] sm:$0xf]
    %v1757 = vld [vmem:[#allocation6 + $0x2b4] sm:$0xf]
    %v1758 = vld [vmem:[#allocation6 + $0x2b8] sm:$0xf]
    %v1759 = vld [vmem:[#allocation6 + $0x2bc] sm:$0xf]
    %v1760 = vld [vmem:[#allocation7 + $0x4] sm:$0x1]
    %v1761 = vperm.slane %v1760, 0
    %v1778 = vunpack.c.l.b16 %v1744
    %v1779 = vunpack.c.l.b16 %v1745
    %v1780 = vunpack.c.l.b16 %v1746
    %v1781 = vunpack.c.l.b16 %v1747
    %v1782 = vunpack.c.l.b16 %v1748
    %v1783 = vunpack.c.l.b16 %v1749
    %v1784 = vunpack.c.l.b16 %v1750
    %v1785 = vunpack.c.l.b16 %v1751
    %v1786 = vunpack.c.l.b16 %v1752
    %v1787 = vunpack.c.l.b16 %v1753
    %v1788 = vunpack.c.l.b16 %v1754
    %v1789 = vunpack.c.l.b16 %v1755
    %v1790 = vunpack.c.l.b16 %v1756
    %v1791 = vunpack.c.l.b16 %v1757
    %v1792 = vunpack.c.l.b16 %v1758
    %v1793 = vunpack.c.l.b16 %v1759
    %v1794 = vpack.c.b16 %v1779, %v1778
    %v1795 = vpack.c.b16 %v1781, %v1780
    %v1796 = vpack.c.b16 %v1783, %v1782
    %v1797 = vpack.c.b16 %v1785, %v1784
    %v1798 = vpack.c.b16 %v1787, %v1786
    %v1799 = vpack.c.b16 %v1789, %v1788
    %v1800 = vpack.c.b16 %v1791, %v1790
    %v1801 = vpack.c.b16 %v1793, %v1792
    %1810 = vmatpush.bf16.msra.mxu0 %v1801
    %1811 = vmatpush.bf16.msra.mxu0 %v1800
    %1812 = vmatpush.bf16.msra.mxu0 %v1799
    %1813 = vmatpush.bf16.msra.mxu0 %v1798
    %1814 = vmatpush.bf16.msra.mxu0 %v1797
    %1815 = vmatpush.bf16.msra.mxu0 %v1796
    %1816 = vmatpush.bf16.msra.mxu0 %v1795
    %1817 = vmatpush.bf16.msra.mxu0 %v1794
    %1818 = vmatmul.bf16.gmra.mxu0 %v1736
    %v1819 = vpop.f32.mrf.mxu0
    %v1820 = vadd.f32 %v1761, %v1819
    %v1821 = vpop.f32.mrf.mxu0
    %v1822 = vadd.f32 %v1761, %v1821
    %1823 = vmatmul.bf16.gmra.mxu0 %v1737
    %v1824 = vpop.f32.mrf.mxu0
    %v1825 = vadd.f32 %v1761, %v1824
    %v1826 = vpop.f32.mrf.mxu0
    %v1827 = vadd.f32 %v1761, %v1826
    %1828 = vmatmul.bf16.gmra.mxu0 %v1738
    %v1829 = vpop.f32.mrf.mxu0
    %v1830 = vadd.f32 %v1761, %v1829
    %v1831 = vpop.f32.mrf.mxu0
    %v1832 = vadd.f32 %v1761, %v1831
    %1833 = vmatmul.bf16.gmra.mxu0 %v1739
    %v1834 = vpop.f32.mrf.mxu0
    %v1835 = vadd.f32 %v1761, %v1834
    %v1836 = vpop.f32.mrf.mxu0
    %v1837 = vadd.f32 %v1761, %v1836
    %1838 = vmatmul.bf16.gmra.mxu0 %v1740
    %v1839 = vpop.f32.mrf.mxu0
    %v1840 = vadd.f32 %v1761, %v1839
    %v1841 = vpop.f32.mrf.mxu0
    %v1842 = vadd.f32 %v1761, %v1841
    %1843 = vmatmul.bf16.gmra.mxu0 %v1741
    %v1844 = vpop.f32.mrf.mxu0
    %v1845 = vadd.f32 %v1761, %v1844
    %v1846 = vpop.f32.mrf.mxu0
    %v1847 = vadd.f32 %v1761, %v1846
    %1848 = vmatmul.bf16.gmra.mxu0 %v1742
    %v1849 = vpop.f32.mrf.mxu0
    %v1850 = vadd.f32 %v1761, %v1849
    %v1851 = vpop.f32.mrf.mxu0
    %v1852 = vadd.f32 %v1761, %v1851
    %1853 = vmatmul.bf16.gmra.mxu0 %v1743
    %v1854 = vpop.f32.mrf.mxu0
    %v1855 = vadd.f32 %v1761, %v1854
    %v1856 = vpop.f32.mrf.mxu0
    %v1857 = vadd.f32 %v1761, %v1856
    %1858 = vdwg.mxu0
    %v1859 = vmul.f32 %v1820, 0.2
    %v1860 = vmul.f32 %v1822, 0.2
    %v1861 = vmul.f32 %v1825, 0.2
    %v1862 = vmul.f32 %v1827, 0.2
    %v1863 = vmul.f32 %v1830, 0.2
    %v1864 = vmul.f32 %v1832, 0.2
    %v1865 = vmul.f32 %v1835, 0.2
    %v1866 = vmul.f32 %v1837, 0.2
    %v1867 = vmul.f32 %v1840, 0.2
    %v1868 = vmul.f32 %v1842, 0.2
    %v1869 = vmul.f32 %v1845, 0.2
    %v1870 = vmul.f32 %v1847, 0.2
    %v1871 = vmul.f32 %v1850, 0.2
    %v1872 = vmul.f32 %v1852, 0.2
    %v1873 = vmul.f32 %v1855, 0.2
    %v1874 = vmul.f32 %v1857, 0.2
    %v1875 = vmax.f32 %v1820, %v1859
    %v1876 = vmax.f32 %v1822, %v1860
    %v1877 = vmax.f32 %v1825, %v1861
    %v1878 = vmax.f32 %v1827, %v1862
    %v1879 = vmax.f32 %v1830, %v1863
    %v1880 = vmax.f32 %v1832, %v1864
    %v1881 = vmax.f32 %v1835, %v1865
    %v1882 = vmax.f32 %v1837, %v1866
    %v1883 = vmax.f32 %v1840, %v1867
    %v1884 = vmax.f32 %v1842, %v1868
    %v1885 = vmax.f32 %v1845, %v1869
    %v1886 = vmax.f32 %v1847, %v1870
    %v1887 = vmax.f32 %v1850, %v1871
    %v1888 = vmax.f32 %v1852, %v1872
    %v1889 = vmax.f32 %v1855, %v1873
    %v1890 = vmax.f32 %v1857, %v1874
    %v1891 = vpack.c.bf16 %v1876, %v1875
    %v1892 = vpack.c.bf16 %v1878, %v1877
    %v1893 = vpack.c.bf16 %v1880, %v1879
    %v1894 = vpack.c.bf16 %v1882, %v1881
    %v1895 = vpack.c.bf16 %v1884, %v1883
    %v1896 = vpack.c.bf16 %v1886, %v1885
    %v1897 = vpack.c.bf16 %v1888, %v1887
    %v1898 = vpack.c.bf16 %v1890, %v1889
    %v1899 = vld [vmem:[#allocation6 + $0x2c0] sm:$0xf]
    %v1900 = vld [vmem:[#allocation6 + $0x2c4] sm:$0xf]
    %v1901 = vld [vmem:[#allocation6 + $0x2c8] sm:$0xf]
    %v1902 = vld [vmem:[#allocation6 + $0x2cc] sm:$0xf]
    %v1903 = vld [vmem:[#allocation6 + $0x2d0] sm:$0xf]
    %v1904 = vld [vmem:[#allocation6 + $0x2d4] sm:$0xf]
    %v1905 = vld [vmem:[#allocation6 + $0x2d8] sm:$0xf]
    %v1906 = vld [vmem:[#allocation6 + $0x2dc] sm:$0xf]
    %v1907 = vld [vmem:[#allocation6 + $0x2e0] sm:$0xf]
    %v1908 = vld [vmem:[#allocation6 + $0x2e4] sm:$0xf]
    %v1909 = vld [vmem:[#allocation6 + $0x2e8] sm:$0xf]
    %v1910 = vld [vmem:[#allocation6 + $0x2ec] sm:$0xf]
    %v1911 = vld [vmem:[#allocation6 + $0x2f0] sm:$0xf]
    %v1912 = vld [vmem:[#allocation6 + $0x2f4] sm:$0xf]
    %v1913 = vld [vmem:[#allocation6 + $0x2f8] sm:$0xf]
    %v1914 = vld [vmem:[#allocation6 + $0x2fc] sm:$0xf]
    %v1915 = vld [vmem:[#allocation7 + $0x5] sm:$0x1]
    %v1916 = vperm.slane %v1915, 0
    %v1933 = vunpack.c.l.b16 %v1899
    %v1934 = vunpack.c.l.b16 %v1900
    %v1935 = vunpack.c.l.b16 %v1901
    %v1936 = vunpack.c.l.b16 %v1902
    %v1937 = vunpack.c.l.b16 %v1903
    %v1938 = vunpack.c.l.b16 %v1904
    %v1939 = vunpack.c.l.b16 %v1905
    %v1940 = vunpack.c.l.b16 %v1906
    %v1941 = vunpack.c.l.b16 %v1907
    %v1942 = vunpack.c.l.b16 %v1908
    %v1943 = vunpack.c.l.b16 %v1909
    %v1944 = vunpack.c.l.b16 %v1910
    %v1945 = vunpack.c.l.b16 %v1911
    %v1946 = vunpack.c.l.b16 %v1912
    %v1947 = vunpack.c.l.b16 %v1913
    %v1948 = vunpack.c.l.b16 %v1914
    %v1949 = vpack.c.b16 %v1934, %v1933
    %v1950 = vpack.c.b16 %v1936, %v1935
    %v1951 = vpack.c.b16 %v1938, %v1937
    %v1952 = vpack.c.b16 %v1940, %v1939
    %v1953 = vpack.c.b16 %v1942, %v1941
    %v1954 = vpack.c.b16 %v1944, %v1943
    %v1955 = vpack.c.b16 %v1946, %v1945
    %v1956 = vpack.c.b16 %v1948, %v1947
    %1965 = vmatpush.bf16.msra.mxu0 %v1956
    %1966 = vmatpush.bf16.msra.mxu0 %v1955
    %1967 = vmatpush.bf16.msra.mxu0 %v1954
    %1968 = vmatpush.bf16.msra.mxu0 %v1953
    %1969 = vmatpush.bf16.msra.mxu0 %v1952
    %1970 = vmatpush.bf16.msra.mxu0 %v1951
    %1971 = vmatpush.bf16.msra.mxu0 %v1950
    %1972 = vmatpush.bf16.msra.mxu0 %v1949
    %1973 = vmatmul.bf16.gmra.mxu0 %v1891
    %v1974 = vpop.f32.mrf.mxu0
    %v1975 = vadd.f32 %v1916, %v1974
    %v1976 = vpop.f32.mrf.mxu0
    %v1977 = vadd.f32 %v1916, %v1976
    %1978 = vmatmul.bf16.gmra.mxu0 %v1892
    %v1979 = vpop.f32.mrf.mxu0
    %v1980 = vadd.f32 %v1916, %v1979
    %v1981 = vpop.f32.mrf.mxu0
    %v1982 = vadd.f32 %v1916, %v1981
    %1983 = vmatmul.bf16.gmra.mxu0 %v1893
    %v1984 = vpop.f32.mrf.mxu0
    %v1985 = vadd.f32 %v1916, %v1984
    %v1986 = vpop.f32.mrf.mxu0
    %v1987 = vadd.f32 %v1916, %v1986
    %1988 = vmatmul.bf16.gmra.mxu0 %v1894
    %v1989 = vpop.f32.mrf.mxu0
    %v1990 = vadd.f32 %v1916, %v1989
    %v1991 = vpop.f32.mrf.mxu0
    %v1992 = vadd.f32 %v1916, %v1991
    %1993 = vmatmul.bf16.gmra.mxu0 %v1895
    %v1994 = vpop.f32.mrf.mxu0
    %v1995 = vadd.f32 %v1916, %v1994
    %v1996 = vpop.f32.mrf.mxu0
    %v1997 = vadd.f32 %v1916, %v1996
    %1998 = vmatmul.bf16.gmra.mxu0 %v1896
    %v1999 = vpop.f32.mrf.mxu0
    %v2000 = vadd.f32 %v1916, %v1999
    %v2001 = vpop.f32.mrf.mxu0
    %v2002 = vadd.f32 %v1916, %v2001
    %2003 = vmatmul.bf16.gmra.mxu0 %v1897
    %v2004 = vpop.f32.mrf.mxu0
    %v2005 = vadd.f32 %v1916, %v2004
    %v2006 = vpop.f32.mrf.mxu0
    %v2007 = vadd.f32 %v1916, %v2006
    %2008 = vmatmul.bf16.gmra.mxu0 %v1898
    %v2009 = vpop.f32.mrf.mxu0
    %v2010 = vadd.f32 %v1916, %v2009
    %v2011 = vpop.f32.mrf.mxu0
    %v2012 = vadd.f32 %v1916, %v2011
    %2013 = vdwg.mxu0
    %vm2014 = vcmask 7168
    %2015 = vst.msk [vmem:[%s4] sm:$0xff] %vm2014, %v1975
    %2016 = vst.msk [vmem:[%s4 + $0x8] sm:$0xff] %vm2014, %v1977
    %2017 = vst.msk [vmem:[%s4 + $0x10] sm:$0xff] %vm2014, %v1980
    %2018 = vst.msk [vmem:[%s4 + $0x18] sm:$0xff] %vm2014, %v1982
    %2019 = vst.msk [vmem:[%s4 + $0x20] sm:$0xff] %vm2014, %v1985
    %2020 = vst.msk [vmem:[%s4 + $0x28] sm:$0xff] %vm2014, %v1987
    %2021 = vst.msk [vmem:[%s4 + $0x30] sm:$0xff] %vm2014, %v1990
    %2022 = vst.msk [vmem:[%s4 + $0x38] sm:$0xff] %vm2014, %v1992
    %2023 = vst.msk [vmem:[%s4 + $0x40] sm:$0xff] %vm2014, %v1995
    %2024 = vst.msk [vmem:[%s4 + $0x48] sm:$0xff] %vm2014, %v1997
    %2025 = vst.msk [vmem:[%s4 + $0x50] sm:$0xff] %vm2014, %v2000
    %2026 = vst.msk [vmem:[%s4 + $0x58] sm:$0xff] %vm2014, %v2002
    %2027 = vst.msk [vmem:[%s4 + $0x60] sm:$0xff] %vm2014, %v2005
    %2028 = vst.msk [vmem:[%s4 + $0x68] sm:$0xff] %vm2014, %v2007
    %2029 = vst.msk [vmem:[%s4 + $0x70] sm:$0xff] %vm2014, %v2010
    %2030 = vst.msk [vmem:[%s4 + $0x78] sm:$0xff] %vm2014, %v2012
    // Predicated region
    $region34: #{tpu_custom_call.1} parent=1 // pred_check
      _
    $region35: #{tpu_custom_call.1} parent=1 // pred_check_branch
      %2032 = sbr.rel (0) target = $region37
    $region36: #{tpu_custom_call.1} parent=1 // pred_region
      _
    $region37: #{tpu_custom_call.1} parent=1 // pred_fallthru
      _
    // Predicated region
    $region38: #{tpu_custom_call.1} parent=1 // pred_check
      _
    $region39: #{tpu_custom_call.1} parent=1 // pred_check_branch
      %2034 = sbr.rel (0) target = $region41
    $region40: #{tpu_custom_call.1} parent=1 // pred_region
      _
    $region41: #{tpu_custom_call.1} parent=1 // pred_fallthru
      _
    %2035 = vsyncpa [#allocation3], 1
    %2036 = vsyncpa [#allocation5], 1
    %2037 = vsyncpa [#allocation8], 1

</llo_original>
